<compile_context>
chip_gen: v7x
topology: tpu7x:2x2x1
jax: 0.10.0
libtpu: 0.0.40
codegen_flags: <defaults>
</compile_context>

<pallas_src>
import functools

import jax
import jax.numpy as jnp
from jax.experimental import pallas as pl
from jax.experimental.pallas import tpu as pltpu


# -----------------------------------------------------------------------------
# tiling helpers
# -----------------------------------------------------------------------------
def _choose_hw_tile(L, target):
    """Lane tile for the flattened spatial axis.

    Only exact divisors of L that are multiples of 128 are considered so no
    padding / slicing (extra HBM round trips) is ever needed.  If L is not
    128-aligned (the common ResNet case: 3136, 784, 196, 49) we use the full
    extent, which is always a legal block."""
    if L % 128 != 0:
        return L
    divs = [d for d in range(128, L + 1, 128) if L % d == 0]
    le = [d for d in divs if d <= target]
    if le and le[-1] >= min(512, L):
        return le[-1]
    ge = [d for d in divs if d >= target]
    return ge[0] if ge else L


def _choose_c_block(C, target):
    """Channel block: full when small, `target` when it divides exactly."""
    if C <= target or C % target != 0:
        return C
    return target


# -----------------------------------------------------------------------------
# 1x1 conv (+ folded BN bias) (+ residual) + ReLU
# grid = (N, Cout blocks, HW tiles, Cin blocks);  Cin is the reduction axis
# -----------------------------------------------------------------------------
def _conv1x1_kernel(x_ref, w_ref, b_ref, o_ref, acc_ref):
    @pl.when(pl.program_id(3) == 0)
    def _():
        acc_ref[...] = jnp.zeros_like(acc_ref)

    acc_ref[...] += jnp.dot(w_ref[...], x_ref[...].astype(w_ref.dtype),
                            preferred_element_type=jnp.float32)

    @pl.when(pl.program_id(3) == pl.num_programs(3) - 1)
    def _():
        y = acc_ref[...] + b_ref[...]
        o_ref[...] = jnp.maximum(y, 0.0).astype(o_ref.dtype)


def _conv1x1_res_kernel(x_ref, w_ref, b_ref, res_ref, o_ref, acc_ref):
    @pl.when(pl.program_id(3) == 0)
    def _():
        acc_ref[...] = jnp.zeros_like(acc_ref)

    acc_ref[...] += jnp.dot(w_ref[...], x_ref[...].astype(w_ref.dtype),
                            preferred_element_type=jnp.float32)

    @pl.when(pl.program_id(3) == pl.num_programs(3) - 1)
    def _():
        y = acc_ref[...] + b_ref[...] + res_ref[...].astype(jnp.float32)
        o_ref[...] = jnp.maximum(y, 0.0).astype(o_ref.dtype)


def _fused_conv1x1(x3, w, b2d, residual=None, *, out_dtype,
                   t_hw_target=1024, t_cout_target=256, t_cin_target=512):
    """x3: (N, Cin, L); w: (Cout, Cin); b2d: (Cout, 1) f32;
    residual: optional (N, Cout, L) added (in f32) before the final ReLU."""
    N, Cin, L = x3.shape
    Cout = w.shape[0]
    t_hw = _choose_hw_tile(L, t_hw_target)
    t_cout = _choose_c_block(Cout, t_cout_target)
    t_cin = _choose_c_block(Cin, t_cin_target)
    grid = (N, Cout // t_cout, L // t_hw, Cin // t_cin)

    in_specs = [
        pl.BlockSpec((None, t_cin, t_hw), lambda n, co, j, ci: (n, ci, j)),
        pl.BlockSpec((t_cout, t_cin),     lambda n, co, j, ci: (co, ci)),
        pl.BlockSpec((t_cout, 1),         lambda n, co, j, ci: (co, 0)),
    ]
    args = [x3, w, b2d]
    if residual is None:
        kernel = _conv1x1_kernel
    else:
        kernel = _conv1x1_res_kernel
        in_specs.append(pl.BlockSpec((None, t_cout, t_hw),
                                     lambda n, co, j, ci: (n, co, j)))
        args.append(residual)
    out_specs = pl.BlockSpec((None, t_cout, t_hw), lambda n, co, j, ci: (n, co, j))

    # Explicit scoped-VMEM budget from the chosen tile footprint (double
    # buffered), with headroom; capped so it is still valid on v7x (64 MiB).
    out_isz = jnp.dtype(out_dtype).itemsize
    est = (2 * t_cin * t_hw * x3.dtype.itemsize
           + 2 * t_cout * t_cin * w.dtype.itemsize
           + 2 * t_cout * 4
           + 2 * t_cout * t_hw * out_isz
           + t_cout * t_hw * 4)                       # f32 accumulator
    if residual is not None:
        est += 2 * t_cout * t_hw * residual.dtype.itemsize
    vmem_limit = int(min(max(2 * est + (8 << 20), 32 << 20), 48 << 20))

    bytes_accessed = sum(int(a.size) * a.dtype.itemsize for a in args)
    bytes_accessed += N * Cout * L * out_isz
    cost = pl.CostEstimate(flops=2 * N * L * Cin * Cout, transcendentals=0,
                           bytes_accessed=int(bytes_accessed))

    return pl.pallas_call(
        kernel,
        out_shape=jax.ShapeDtypeStruct((N, Cout, L), out_dtype),
        grid_spec=pltpu.PrefetchScalarGridSpec(
            num_scalar_prefetch=0,
            grid=grid,
            in_specs=in_specs,
            out_specs=out_specs,
            scratch_shapes=[pltpu.VMEM((t_cout, t_hw), jnp.float32)]),
        compiler_params=pltpu.CompilerParams(
            dimension_semantics=("parallel", "parallel", "parallel", "arbitrary"),
            vmem_limit_bytes=vmem_limit),
        cost_estimate=cost,
    )(*args)


# -----------------------------------------------------------------------------
# 3x3 conv (pad=1) + folded BN bias + ReLU, taps accumulated in-kernel
# -----------------------------------------------------------------------------
def _conv3x3_kernel(x_ref, w_ref, b_ref, o_ref, *, H, W):
    HW = H * W
    x = x_ref[...]                                   # (Cin, HW), compute dtype
    cin = x.shape[0]
    col = jax.lax.broadcasted_iota(jnp.int32, (1, HW), 1) % W
    zc = jnp.zeros((cin, 1), x.dtype)
    # column taps: value at (h, w-1) / (h, w+1), zero at the left/right border
    x_m = jnp.where(col == 0,     0, jnp.concatenate([zc, x[:, :HW - 1]], axis=1))
    x_p = jnp.where(col == W - 1, 0, jnp.concatenate([x[:, 1:], zc], axis=1))
    xs = jnp.concatenate([x_m, x, x_p], axis=0)      # (3*Cin, HW), kw-major
    # one MXU matmul per kernel row kh, contracting (kw, cin) at once
    q0 = jnp.dot(w_ref[0], xs, preferred_element_type=jnp.float32)   # kh = 0
    q1 = jnp.dot(w_ref[1], xs, preferred_element_type=jnp.float32)   # kh = 1
    q2 = jnp.dot(w_ref[2], xs, preferred_element_type=jnp.float32)   # kh = 2
    cout = q1.shape[0]
    zr = jnp.zeros((cout, W), jnp.float32)
    # row taps: shift the kh=0 / kh=2 partial sums by -/+ one image row
    # (W lanes); the zero blocks realise the top/bottom zero padding.
    y = q1
    y = y + jnp.concatenate([zr, q0[:, :HW - W]], axis=1)
    y = y + jnp.concatenate([q2[:, W:], zr], axis=1)
    y = y + b_ref[...]
    o_ref[...] = jnp.maximum(y, 0.0).astype(o_ref.dtype)


def _fused_conv3x3(h1, w2r, b2d, *, H, W, out_dtype, t_cout_target=256):
    """h1: (N, Cin, H*W); w2r: (3, Cout, 3*Cin) (kh, out, kw-major/cin-minor);
    b2d: (Cout, 1) f32.  Full H*W per step (ResNet spatial extents are small
    relative to VMEM for the narrow middle tensor)."""
    N, Cin, HW = h1.shape
    _, Cout, Cin3 = w2r.shape
    t_cout = _choose_c_block(Cout, t_cout_target)
    grid = (N, Cout // t_cout)

    out_isz = jnp.dtype(out_dtype).itemsize
    est = (2 * Cin * HW * h1.dtype.itemsize
           + 2 * 3 * t_cout * Cin3 * w2r.dtype.itemsize
           + 2 * t_cout * HW * out_isz
           + 3 * Cin * HW * h1.dtype.itemsize        # stacked column taps
           + 4 * t_cout * HW * 4)                    # q0..q2, y in f32
    vmem_limit = int(min(max(2 * est + (8 << 20), 32 << 20), 48 << 20))

    bytes_accessed = (int(h1.size) * h1.dtype.itemsize
                      + int(w2r.size) * w2r.dtype.itemsize
                      + int(b2d.size) * b2d.dtype.itemsize
                      + N * Cout * HW * out_isz)
    cost = pl.CostEstimate(flops=2 * N * Cout * 3 * Cin3 * HW, transcendentals=0,
                           bytes_accessed=int(bytes_accessed))

    return pl.pallas_call(
        functools.partial(_conv3x3_kernel, H=H, W=W),
        out_shape=jax.ShapeDtypeStruct((N, Cout, HW), out_dtype),
        grid_spec=pltpu.PrefetchScalarGridSpec(
            num_scalar_prefetch=0,
            grid=grid,
            in_specs=[
                pl.BlockSpec((None, Cin, HW),   lambda n, co: (n, 0, 0)),
                pl.BlockSpec((3, t_cout, Cin3), lambda n, co: (0, co, 0)),
                pl.BlockSpec((t_cout, 1),       lambda n, co: (co, 0)),
            ],
            out_specs=pl.BlockSpec((None, t_cout, HW), lambda n, co: (n, co, 0)),
        ),
        compiler_params=pltpu.CompilerParams(
            dimension_semantics=("parallel", "parallel"),
            vmem_limit_bytes=vmem_limit),
        cost_estimate=cost,
    )(h1, w2r, b2d)


# -----------------------------------------------------------------------------
# module-level wrapper
# -----------------------------------------------------------------------------
def _fold_bn(w, gamma, beta, mean, var, eps):
    scale = gamma / jnp.sqrt(var + eps)
    return (w * scale.reshape((-1,) + (1,) * (w.ndim - 1)),
            beta - mean * scale)


def prepare_bottleneck_params(params, *, eps=1e-5, compute_dtype=jnp.bfloat16):
    """Fold eval-mode BN into the conv weights once (hoisted out of the
    per-forward path), pre-arrange the 3x3 weight for the in-kernel tap
    accumulation, and pre-cast everything to the compute dtype."""
    (w1, g1, b1, m1, v1,
     w2, g2, b2, m2, v2,
     w3, g3, b3, m3, v3) = params
    w1s, bias1 = _fold_bn(w1, g1, b1, m1, v1, eps)    # (width, Cin)
    w2s, bias2 = _fold_bn(w2, g2, b2, m2, v2, eps)    # (width, width, 3, 3)
    w3s, bias3 = _fold_bn(w3, g3, b3, m3, v3, eps)    # (Cout, width)
    width = w2s.shape[0]
    # (O, I, kh, kw) -> (kh, O, kw, I) -> (3, O, 3*I): kw-major / channel-minor
    # columns, matching the [x(w-1), x(w), x(w+1)] stacking inside the kernel.
    w2r = jnp.transpose(w2s, (2, 0, 3, 1)).reshape(3, width, 3 * w2s.shape[1])
    cd = compute_dtype
    return dict(
        w1=w1s.astype(cd), b1=bias1.reshape(-1, 1).astype(jnp.float32),
        w2=w2r.astype(cd), b2=bias2.reshape(-1, 1).astype(jnp.float32),
        w3=w3s.astype(cd), b3=bias3.reshape(-1, 1).astype(jnp.float32),
    )


def bottleneck_forward(x, prep, *, t_hw_target=1024):
    """Bottleneck.forward (eval-mode BN folded; stride=1, groups=1, dilation=1,
    downsample=None).  x: (N, C, H, W) NCHW with C == planes*expansion."""
    N, Cin, H, W = x.shape
    Cout = prep["w3"].shape[0]
    assert Cout == Cin, "identity residual needs inplanes == planes*expansion"
    cd = prep["w1"].dtype
    HW = H * W
    x3 = x.reshape(N, Cin, HW)            # pure reshape, no transpose, no pad

    # stage 1: conv1x1 + bn1 + relu  (bf16 activation written to HBM)
    h1 = _fused_conv1x1(x3, prep["w1"], prep["b1"], out_dtype=cd,
                        t_hw_target=t_hw_target)
    # stage 2: conv3x3(pad=1) + bn2 + relu, all 9 taps accumulated in-kernel
    h2 = _fused_conv3x3(h1, prep["w2"], prep["b2"], H=H, W=W, out_dtype=cd)
    # stage 3: conv1x1 + bn3 + identity add + relu (residual kept at x.dtype)
    out = _fused_conv1x1(h2, prep["w3"], prep["b3"], residual=x3,
                         out_dtype=x.dtype, t_hw_target=t_hw_target)
    return out.reshape(N, Cout, H, W)


if __name__ == "__main__":
    key = jax.random.PRNGKey(0)
    keys = jax.random.split(key, 7)

    # Bottleneck defaults: groups=1, base_width=64 -> width=planes; expansion=4.
    # Identity residual (downsample=None) requires inplanes == planes*expansion.
    N, planes, H, W = 2, 8, 16, 16
    width = planes
    inplanes = planes * 4
    Cout = planes * 4

    x = jax.random.normal(keys[0], (N, inplanes, H, W), dtype=jnp.float32)

    w1 = jax.random.normal(keys[1], (width, inplanes), jnp.float32) / jnp.sqrt(inplanes)
    w2 = jax.random.normal(keys[2], (width, width, 3, 3), jnp.float32) / jnp.sqrt(9.0 * width)
    w3 = jax.random.normal(keys[3], (Cout, width), jnp.float32) / jnp.sqrt(width)

    def bn_params(k, c):
        k1, k2, k3, k4 = jax.random.split(k, 4)
        gamma = 0.5 + jax.random.uniform(k1, (c,), jnp.float32)
        beta = 0.1 * jax.random.normal(k2, (c,), jnp.float32)
        mean = 0.1 * jax.random.normal(k3, (c,), jnp.float32)
        var = 0.5 + jax.random.uniform(k4, (c,), jnp.float32)
        return gamma, beta, mean, var

    g1, b1, m1, v1 = bn_params(keys[4], width)
    g2, b2, m2, v2 = bn_params(keys[5], width)
    g3, b3, m3, v3 = bn_params(keys[6], Cout)

    params = (w1, g1, b1, m1, v1,
              w2, g2, b2, m2, v2,
              w3, g3, b3, m3, v3)

    # ---- pure-JAX NCHW reference of Bottleneck.forward (eval-mode BN) -------
    eps = 1e-5
    hi = jax.lax.Precision.HIGHEST

    def bn(y, gamma, beta, mean, var):
        s = gamma / jnp.sqrt(var + eps)
        return y * s[None, :, None, None] + (beta - mean * s)[None, :, None, None]

    r = jnp.einsum('nchw,oc->nohw', x, w1, precision=hi)
    r = jnp.maximum(bn(r, g1, b1, m1, v1), 0.0)
    r = jax.lax.conv_general_dilated(r, w2, window_strides=(1, 1),
                                     padding=((1, 1), (1, 1)),
                                     dimension_numbers=('NCHW', 'OIHW', 'NCHW'),
                                     precision=hi)
    r = jnp.maximum(bn(r, g2, b2, m2, v2), 0.0)
    r = jnp.einsum('nchw,oc->nohw', r, w3, precision=hi)
    ref = jnp.maximum(bn(r, g3, b3, m3, v3) + x, 0.0)

    fwd = jax.jit(bottleneck_forward)

    # fast path: bf16 matmul operands / bf16 inter-stage activations
    prep_bf16 = prepare_bottleneck_params(params, eps=eps,
                                          compute_dtype=jnp.bfloat16)
    out_fast = jax.block_until_ready(fwd(x, prep_bf16))
    assert out_fast.shape == x.shape
    err_fast = float(jnp.max(jnp.abs(out_fast - ref)))
    assert jnp.allclose(out_fast, ref, atol=1e-1, rtol=1e-1), err_fast

    # exactness check: identical kernels with f32 compute
    prep_f32 = prepare_bottleneck_params(params, eps=eps,
                                         compute_dtype=jnp.float32)
    out_f32 = jax.block_until_ready(fwd(x, prep_f32))
    err_f32 = float(jnp.max(jnp.abs(out_f32 - ref)))
    assert jnp.allclose(out_f32, ref, atol=2e-3, rtol=2e-3), err_f32

    print("KERNEL_OK")
</pallas_src>

<mosaic_0001>
module attributes {stable_mosaic.version = 11 : i64} {
  func.func @_conv1x1_res_kernel(%arg0: i32, %arg1: i32, %arg2: i32, %arg3: i32, %arg4: memref<1x8x256xbf16, #tpu.memory_space<vmem>>, %arg5: memref<32x8xbf16, #tpu.memory_space<vmem>>, %arg6: memref<32x1xf32, #tpu.memory_space<vmem>>, %arg7: memref<1x32x256xf32, #tpu.memory_space<vmem>>, %arg8: memref<1x32x256xf32, #tpu.memory_space<vmem>>, %arg9: memref<32x256xf32, #tpu.memory_space<vmem>>) attributes {dimension_semantics = [#tpu.dimension_semantics<parallel>, #tpu.dimension_semantics<parallel>, #tpu.dimension_semantics<parallel>, #tpu.dimension_semantics<arbitrary>], iteration_bounds = array<i64: 2, 1, 1, 1>, scalar_prefetch = 0 : i64, scratch_operands = 1 : i64, tpu.core_type = #tpu.core_type<tc>, window_params = [{transform_indices = @transform_0, window_bounds = array<i64: 1, 8, 256>}, {transform_indices = @transform_1, window_bounds = array<i64: 32, 8>}, {transform_indices = @transform_2, window_bounds = array<i64: 32, 1>}, {transform_indices = @transform_3, window_bounds = array<i64: 1, 32, 256>}, {transform_indices = @transform_4, window_bounds = array<i64: 1, 32, 256>}]} {
    %c0_i32 = arith.constant 0 : i32
    %0 = arith.cmpi eq, %arg3, %c0_i32 : i32
    %1 = arith.extui %0 : i1 to i32
    %c0_i32_0 = arith.constant 0 : i32
    %2 = arith.cmpi ne, %1, %c0_i32_0 : i32
    scf.if %2 {
      %cst_11 = arith.constant 0.000000e+00 : f32
      %13 = vector.broadcast %cst_11 : f32 to vector<32x256xf32>
      %c0_12 = arith.constant 0 : index
      %c0_13 = arith.constant 0 : index
      %14 = vector.load %arg9[%c0_12, %c0_13] : memref<32x256xf32, #tpu.memory_space<vmem>>, vector<32x256xf32>
      tpu.vector_store %arg9[%c0_12, %c0_13], %13 {strides = array<i32>} : memref<32x256xf32, #tpu.memory_space<vmem>>, vector<32x256xf32>,
    } else {
    }
    %c0 = arith.constant 0 : index
    %c0_1 = arith.constant 0 : index
    %3 = vector.load %arg9[%c0, %c0_1] : memref<32x256xf32, #tpu.memory_space<vmem>>, vector<32x256xf32>
    %c0_2 = arith.constant 0 : index
    %c0_3 = arith.constant 0 : index
    %4 = vector.load %arg5[%c0_2, %c0_3] : memref<32x8xbf16, #tpu.memory_space<vmem>>, vector<32x8xbf16>
    %c0_4 = arith.constant 0 : index
    %c0_5 = arith.constant 0 : index
    %c0_6 = arith.constant 0 : index
    %5 = vector.load %arg4[%c0_4, %c0_5, %c0_6] : memref<1x8x256xbf16, #tpu.memory_space<vmem>>, vector<1x8x256xbf16>
    %6 = vector.shape_cast %5 : vector<1x8x256xbf16> to vector<8x256xbf16>
    %cst = arith.constant dense<0.000000e+00> : vector<32x256xf32>
    %7 = tpu.matmul %4, %6, %cst {dimension_numbers = #tpu.dot_dimension_numbers<[1], [0], [0], [1], [0, 0, 1, 1], [], []>} : vector<32x8xbf16>, vector<8x256xbf16>, vector<32x256xf32> -> vector<32x256xf32>
    %8 = arith.addf %3, %7 : vector<32x256xf32>
    %c0_7 = arith.constant 0 : index
    %c0_8 = arith.constant 0 : index
    %9 = vector.load %arg9[%c0_7, %c0_8] : memref<32x256xf32, #tpu.memory_space<vmem>>, vector<32x256xf32>
    tpu.vector_store %arg9[%c0_7, %c0_8], %8 {strides = array<i32>} : memref<32x256xf32, #tpu.memory_space<vmem>>, vector<32x256xf32>,
    %c0_i32_9 = arith.constant 0 : i32
    %10 = arith.cmpi eq, %arg3, %c0_i32_9 : i32
    %11 = arith.extui %10 : i1 to i32
    %c0_i32_10 = arith.constant 0 : i32
    %12 = arith.cmpi ne, %11, %c0_i32_10 : i32
    scf.if %12 {
      %c0_11 = arith.constant 0 : index
      %c0_12 = arith.constant 0 : index
      %13 = vector.load %arg9[%c0_11, %c0_12] : memref<32x256xf32, #tpu.memory_space<vmem>>, vector<32x256xf32>
      %c0_13 = arith.constant 0 : index
      %c0_14 = arith.constant 0 : index
      %14 = vector.load %arg6[%c0_13, %c0_14] : memref<32x1xf32, #tpu.memory_space<vmem>>, vector<32x1xf32>
      %15 = vector.broadcast %14 : vector<32x1xf32> to vector<32x256xf32>
      %16 = arith.addf %13, %15 : vector<32x256xf32>
      %c0_15 = arith.constant 0 : index
      %c0_16 = arith.constant 0 : index
      %c0_17 = arith.constant 0 : index
      %17 = vector.load %arg7[%c0_15, %c0_16, %c0_17] : memref<1x32x256xf32, #tpu.memory_space<vmem>>, vector<1x32x256xf32>
      %18 = vector.shape_cast %17 : vector<1x32x256xf32> to vector<32x256xf32>
      %19 = arith.addf %16, %18 : vector<32x256xf32>
      %cst_18 = arith.constant 0.000000e+00 : f32
      %20 = vector.broadcast %cst_18 : f32 to vector<32x256xf32>
      %21 = arith.maximumf %19, %20 : vector<32x256xf32>
      %c0_19 = arith.constant 0 : index
      %c0_20 = arith.constant 0 : index
      %c0_21 = arith.constant 0 : index
      %22 = vector.load %arg8[%c0_19, %c0_20, %c0_21] : memref<1x32x256xf32, #tpu.memory_space<vmem>>, vector<1x32x256xf32>
      %23 = vector.shape_cast %22 : vector<1x32x256xf32> to vector<32x256xf32>
      %24 = vector.shape_cast %21 : vector<32x256xf32> to vector<1x32x256xf32>
      tpu.vector_store %arg8[%c0_19, %c0_20, %c0_21], %24 {strides = array<i32>} : memref<1x32x256xf32, #tpu.memory_space<vmem>>, vector<1x32x256xf32>,
    } else {
    }
    return
  }
  func.func @transform_0(%arg0: i32, %arg1: i32, %arg2: i32, %arg3: i32) -> (i32, i32, i32) {
    %c0_i32 = arith.constant 0 : i32
    return %arg0, %arg3, %arg2 : i32, i32, i32
  }
  func.func @transform_1(%arg0: i32, %arg1: i32, %arg2: i32, %arg3: i32) -> (i32, i32) {
    %c0_i32 = arith.constant 0 : i32
    return %arg1, %arg3 : i32, i32
  }
  func.func @transform_2(%arg0: i32, %arg1: i32, %arg2: i32, %arg3: i32) -> (i32, i32) {
    %c0_i32 = arith.constant 0 : i32
    %c0_i32_0 = arith.constant 0 : i32
    return %arg1, %c0_i32 : i32, i32
  }
  func.func @transform_3(%arg0: i32, %arg1: i32, %arg2: i32, %arg3: i32) -> (i32, i32, i32) {
    %c0_i32 = arith.constant 0 : i32
    return %arg0, %arg1, %arg2 : i32, i32, i32
  }
  func.func @transform_4(%arg0: i32, %arg1: i32, %arg2: i32, %arg3: i32) -> (i32, i32, i32) {
    %c0_i32 = arith.constant 0 : i32
    return %arg0, %arg1, %arg2 : i32, i32, i32
  }
}

module attributes {stable_mosaic.version = 11 : i64} {
  func.func @_conv3x3_kernel(%arg0: i32, %arg1: i32, %arg2: memref<1x8x256xbf16, #tpu.memory_space<vmem>>, %arg3: memref<3x8x24xbf16, #tpu.memory_space<vmem>>, %arg4: memref<8x1xf32, #tpu.memory_space<vmem>>, %arg5: memref<1x8x256xbf16, #tpu.memory_space<vmem>>) attributes {dimension_semantics = [#tpu.dimension_semantics<parallel>, #tpu.dimension_semantics<parallel>], iteration_bounds = array<i64: 2, 1>, scalar_prefetch = 0 : i64, scratch_operands = 0 : i64, tpu.core_type = #tpu.core_type<tc>, window_params = [{transform_indices = @transform_0, window_bounds = array<i64: 1, 8, 256>}, {transform_indices = @transform_1, window_bounds = array<i64: 3, 8, 24>}, {transform_indices = @transform_2, window_bounds = array<i64: 8, 1>}, {transform_indices = @transform_3, window_bounds = array<i64: 1, 8, 256>}]} {
    %c0 = arith.constant 0 : index
    %c0_0 = arith.constant 0 : index
    %c0_1 = arith.constant 0 : index
    %0 = vector.load %arg2[%c0, %c0_0, %c0_1] : memref<1x8x256xbf16, #tpu.memory_space<vmem>>, vector<1x8x256xbf16>
    %1 = vector.shape_cast %0 : vector<1x8x256xbf16> to vector<8x256xbf16>
    %2 = tpu.iota {dimensions = array<i32: 1>} : vector<1x256xi32>
    %c16_i32 = arith.constant 16 : i32
    %c0_i32 = arith.constant 0 : i32
    %3 = arith.cmpi eq, %c16_i32, %c0_i32 : i32
    %c1_i32 = arith.constant 1 : i32
    %4 = arith.select %3, %c1_i32, %c16_i32 : i32
    %5 = vector.broadcast %4 : i32 to vector<1x256xi32>
    %6 = arith.remsi %2, %5 : vector<1x256xi32>
    %c0_i32_2 = arith.constant 0 : i32
    %7 = vector.broadcast %c0_i32_2 : i32 to vector<1x256xi32>
    %8 = arith.cmpi ne, %6, %7 : vector<1x256xi32>
    %c0_i32_3 = arith.constant 0 : i32
    %9 = vector.broadcast %c0_i32_3 : i32 to vector<1x256xi32>
    %10 = arith.cmpi slt, %6, %9 : vector<1x256xi32>
    %c0_i32_4 = arith.constant 0 : i32
    %11 = arith.cmpi slt, %4, %c0_i32_4 : i32
    %12 = vector.broadcast %11 : i1 to vector<1x256xi1>
    %13 = vector.broadcast %12 : vector<1x256xi1> to vector<1x256xi1>
    %14 = arith.xori %10, %13 : vector<1x256xi1>
    %15 = arith.andi %14, %8 : vector<1x256xi1>
    %16 = vector.broadcast %4 : i32 to vector<1x256xi32>
    %17 = arith.addi %6, %16 : vector<1x256xi32>
    %18 = arith.select %15, %17, %6 : vector<1x256xi1>, vector<1x256xi32>
    %cst = arith.constant 0.000000e+00 : bf16
    %19 = vector.broadcast %cst : bf16 to vector<8x1xbf16>
    %c0_i32_5 = arith.constant 0 : i32
    %20 = vector.broadcast %c0_i32_5 : i32 to vector<1x256xi32>
    %21 = arith.cmpi eq, %18, %20 : vector<1x256xi32>
    %22 = vector.extract_strided_slice %1 {offsets = [0, 0], sizes = [8, 255], strides = [1, 1]} : vector<8x256xbf16> to vector<8x255xbf16>
    %23 = tpu.concatenate %19, %22 in 1 : vector<8x1xbf16>, vector<8x255xbf16> -> vector<8x256xbf16>
    %c0_i32_6 = arith.constant 0 : i32
    %24 = arith.sitofp %c0_i32_6 : i32 to bf16
    %25 = vector.shape_cast %21 : vector<1x256xi1> to vector<1x256xi1>
    %26 = vector.broadcast %25 : vector<1x256xi1> to vector<8x256xi1>
    %27 = vector.broadcast %24 : bf16 to vector<8x256xbf16>
    %28 = arith.select %26, %27, %23 : vector<8x256xi1>, vector<8x256xbf16>
    %c15_i32 = arith.constant 15 : i32
    %29 = vector.broadcast %c15_i32 : i32 to vector<1x256xi32>
    %30 = arith.cmpi eq, %18, %29 : vector<1x256xi32>
    %31 = vector.extract_strided_slice %1 {offsets = [0, 1], sizes = [8, 255], strides = [1, 1]} : vector<8x256xbf16> to vector<8x255xbf16>
    %32 = tpu.concatenate %31, %19 in 1 : vector<8x255xbf16>, vector<8x1xbf16> -> vector<8x256xbf16>
    %c0_i32_7 = arith.constant 0 : i32
    %33 = arith.sitofp %c0_i32_7 : i32 to bf16
    %34 = vector.shape_cast %30 : vector<1x256xi1> to vector<1x256xi1>
    %35 = vector.broadcast %34 : vector<1x256xi1> to vector<8x256xi1>
    %36 = vector.broadcast %33 : bf16 to vector<8x256xbf16>
    %37 = arith.select %35, %36, %32 : vector<8x256xi1>, vector<8x256xbf16>
    %38 = tpu.concatenate %28, %1, %37 in 0 : vector<8x256xbf16>, vector<8x256xbf16>, vector<8x256xbf16> -> vector<24x256xbf16>
    %c0_8 = arith.constant 0 : index
    %c0_9 = arith.constant 0 : index
    %c0_10 = arith.constant 0 : index
    %39 = vector.load %arg3[%c0_8, %c0_9, %c0_10] : memref<3x8x24xbf16, #tpu.memory_space<vmem>>, vector<1x8x24xbf16>
    %40 = vector.shape_cast %39 : vector<1x8x24xbf16> to vector<8x24xbf16>
    %cst_11 = arith.constant dense<0.000000e+00> : vector<8x256xf32>
    %41 = tpu.matmul %40, %38, %cst_11 {dimension_numbers = #tpu.dot_dimension_numbers<[1], [0], [0], [1], [0, 0, 1, 1], [], []>} : vector<8x24xbf16>, vector<24x256xbf16>, vector<8x256xf32> -> vector<8x256xf32>
    %c1 = arith.constant 1 : index
    %c0_12 = arith.constant 0 : index
    %c0_13 = arith.constant 0 : index
    %42 = vector.load %arg3[%c1, %c0_12, %c0_13] : memref<3x8x24xbf16, #tpu.memory_space<vmem>>, vector<1x8x24xbf16>
    %43 = vector.shape_cast %42 : vector<1x8x24xbf16> to vector<8x24xbf16>
    %cst_14 = arith.constant dense<0.000000e+00> : vector<8x256xf32>
    %44 = tpu.matmul %43, %38, %cst_14 {dimension_numbers = #tpu.dot_dimension_numbers<[1], [0], [0], [1], [0, 0, 1, 1], [], []>} : vector<8x24xbf16>, vector<24x256xbf16>, vector<8x256xf32> -> vector<8x256xf32>
    %c2 = arith.constant 2 : index
    %c0_15 = arith.constant 0 : index
    %c0_16 = arith.constant 0 : index
    %45 = vector.load %arg3[%c2, %c0_15, %c0_16] : memref<3x8x24xbf16, #tpu.memory_space<vmem>>, vector<1x8x24xbf16>
    %46 = vector.shape_cast %45 : vector<1x8x24xbf16> to vector<8x24xbf16>
    %cst_17 = arith.constant dense<0.000000e+00> : vector<8x256xf32>
    %47 = tpu.matmul %46, %38, %cst_17 {dimension_numbers = #tpu.dot_dimension_numbers<[1], [0], [0], [1], [0, 0, 1, 1], [], []>} : vector<8x24xbf16>, vector<24x256xbf16>, vector<8x256xf32> -> vector<8x256xf32>
    %cst_18 = arith.constant 0.000000e+00 : f32
    %48 = vector.broadcast %cst_18 : f32 to vector<8x16xf32>
    %49 = vector.extract_strided_slice %41 {offsets = [0, 0], sizes = [8, 240], strides = [1, 1]} : vector<8x256xf32> to vector<8x240xf32>
    %50 = tpu.concatenate %48, %49 in 1 : vector<8x16xf32>, vector<8x240xf32> -> vector<8x256xf32>
    %51 = arith.addf %44, %50 : vector<8x256xf32>
    %52 = vector.extract_strided_slice %47 {offsets = [0, 16], sizes = [8, 240], strides = [1, 1]} : vector<8x256xf32> to vector<8x240xf32>
    %53 = tpu.concatenate %52, %48 in 1 : vector<8x240xf32>, vector<8x16xf32> -> vector<8x256xf32>
    %54 = arith.addf %51, %53 : vector<8x256xf32>
    %c0_19 = arith.constant 0 : index
    %c0_20 = arith.constant 0 : index
    %55 = vector.load %arg4[%c0_19, %c0_20] : memref<8x1xf32, #tpu.memory_space<vmem>>, vector<8x1xf32>
    %56 = vector.broadcast %55 : vector<8x1xf32> to vector<8x256xf32>
    %57 = arith.addf %54, %56 : vector<8x256xf32>
    %cst_21 = arith.constant 0.000000e+00 : f32
    %58 = vector.broadcast %cst_21 : f32 to vector<8x256xf32>
    %59 = arith.maximumf %57, %58 : vector<8x256xf32>
    %60 = arith.truncf %59 : vector<8x256xf32> to vector<8x256xbf16>
    %c0_22 = arith.constant 0 : index
    %c0_23 = arith.constant 0 : index
    %c0_24 = arith.constant 0 : index
    %61 = vector.load %arg5[%c0_22, %c0_23, %c0_24] : memref<1x8x256xbf16, #tpu.memory_space<vmem>>, vector<1x8x256xbf16>
    %62 = vector.shape_cast %61 : vector<1x8x256xbf16> to vector<8x256xbf16>
    %63 = vector.shape_cast %60 : vector<8x256xbf16> to vector<1x8x256xbf16>
    tpu.vector_store %arg5[%c0_22, %c0_23, %c0_24], %63 {strides = array<i32>} : memref<1x8x256xbf16, #tpu.memory_space<vmem>>, vector<1x8x256xbf16>,
    return
  }
  func.func @transform_0(%arg0: i32, %arg1: i32) -> (i32, i32, i32) {
    %c0_i32 = arith.constant 0 : i32
    %c0_i32_0 = arith.constant 0 : i32
    %c0_i32_1 = arith.constant 0 : i32
    return %arg0, %c0_i32, %c0_i32_0 : i32, i32, i32
  }
  func.func @transform_1(%arg0: i32, %arg1: i32) -> (i32, i32, i32) {
    %c0_i32 = arith.constant 0 : i32
    %c0_i32_0 = arith.constant 0 : i32
    %c0_i32_1 = arith.constant 0 : i32
    return %c0_i32, %arg1, %c0_i32_0 : i32, i32, i32
  }
  func.func @transform_2(%arg0: i32, %arg1: i32) -> (i32, i32) {
    %c0_i32 = arith.constant 0 : i32
    %c0_i32_0 = arith.constant 0 : i32
    return %arg1, %c0_i32 : i32, i32
  }
  func.func @transform_3(%arg0: i32, %arg1: i32) -> (i32, i32, i32) {
    %c0_i32 = arith.constant 0 : i32
    %c0_i32_0 = arith.constant 0 : i32
    return %arg0, %arg1, %c0_i32 : i32, i32, i32
  }
}

module attributes {stable_mosaic.version = 11 : i64} {
  func.func @_conv1x1_kernel(%arg0: i32, %arg1: i32, %arg2: i32, %arg3: i32, %arg4: memref<1x32x256xf32, #tpu.memory_space<vmem>>, %arg5: memref<8x32xbf16, #tpu.memory_space<vmem>>, %arg6: memref<8x1xf32, #tpu.memory_space<vmem>>, %arg7: memref<1x8x256xbf16, #tpu.memory_space<vmem>>, %arg8: memref<8x256xf32, #tpu.memory_space<vmem>>) attributes {dimension_semantics = [#tpu.dimension_semantics<parallel>, #tpu.dimension_semantics<parallel>, #tpu.dimension_semantics<parallel>, #tpu.dimension_semantics<arbitrary>], iteration_bounds = array<i64: 2, 1, 1, 1>, scalar_prefetch = 0 : i64, scratch_operands = 1 : i64, tpu.core_type = #tpu.core_type<tc>, window_params = [{transform_indices = @transform_0, window_bounds = array<i64: 1, 32, 256>}, {transform_indices = @transform_1, window_bounds = array<i64: 8, 32>}, {transform_indices = @transform_2, window_bounds = array<i64: 8, 1>}, {transform_indices = @transform_3, window_bounds = array<i64: 1, 8, 256>}]} {
    %c0_i32 = arith.constant 0 : i32
    %0 = arith.cmpi eq, %arg3, %c0_i32 : i32
    %1 = arith.extui %0 : i1 to i32
    %c0_i32_0 = arith.constant 0 : i32
    %2 = arith.cmpi ne, %1, %c0_i32_0 : i32
    scf.if %2 {
      %cst_11 = arith.constant 0.000000e+00 : f32
      %14 = vector.broadcast %cst_11 : f32 to vector<8x256xf32>
      %c0_12 = arith.constant 0 : index
      %c0_13 = arith.constant 0 : index
      %15 = vector.load %arg8[%c0_12, %c0_13] : memref<8x256xf32, #tpu.memory_space<vmem>>, vector<8x256xf32>
      tpu.vector_store %arg8[%c0_12, %c0_13], %14 {strides = array<i32>} : memref<8x256xf32, #tpu.memory_space<vmem>>, vector<8x256xf32>,
    } else {
    }
    %c0 = arith.constant 0 : index
    %c0_1 = arith.constant 0 : index
    %3 = vector.load %arg8[%c0, %c0_1] : memref<8x256xf32, #tpu.memory_space<vmem>>, vector<8x256xf32>
    %c0_2 = arith.constant 0 : index
    %c0_3 = arith.constant 0 : index
    %4 = vector.load %arg5[%c0_2, %c0_3] : memref<8x32xbf16, #tpu.memory_space<vmem>>, vector<8x32xbf16>
    %c0_4 = arith.constant 0 : index
    %c0_5 = arith.constant 0 : index
    %c0_6 = arith.constant 0 : index
    %5 = vector.load %arg4[%c0_4, %c0_5, %c0_6] : memref<1x32x256xf32, #tpu.memory_space<vmem>>, vector<1x32x256xf32>
    %6 = vector.shape_cast %5 : vector<1x32x256xf32> to vector<32x256xf32>
    %7 = arith.truncf %6 : vector<32x256xf32> to vector<32x256xbf16>
    %cst = arith.constant dense<0.000000e+00> : vector<8x256xf32>
    %8 = tpu.matmul %4, %7, %cst {dimension_numbers = #tpu.dot_dimension_numbers<[1], [0], [0], [1], [0, 0, 1, 1], [], []>} : vector<8x32xbf16>, vector<32x256xbf16>, vector<8x256xf32> -> vector<8x256xf32>
    %9 = arith.addf %3, %8 : vector<8x256xf32>
    %c0_7 = arith.constant 0 : index
    %c0_8 = arith.constant 0 : index
    %10 = vector.load %arg8[%c0_7, %c0_8] : memref<8x256xf32, #tpu.memory_space<vmem>>, vector<8x256xf32>
    tpu.vector_store %arg8[%c0_7, %c0_8], %9 {strides = array<i32>} : memref<8x256xf32, #tpu.memory_space<vmem>>, vector<8x256xf32>,
    %c0_i32_9 = arith.constant 0 : i32
    %11 = arith.cmpi eq, %arg3, %c0_i32_9 : i32
    %12 = arith.extui %11 : i1 to i32
    %c0_i32_10 = arith.constant 0 : i32
    %13 = arith.cmpi ne, %12, %c0_i32_10 : i32
    scf.if %13 {
      %c0_11 = arith.constant 0 : index
      %c0_12 = arith.constant 0 : index
      %14 = vector.load %arg8[%c0_11, %c0_12] : memref<8x256xf32, #tpu.memory_space<vmem>>, vector<8x256xf32>
      %c0_13 = arith.constant 0 : index
      %c0_14 = arith.constant 0 : index
      %15 = vector.load %arg6[%c0_13, %c0_14] : memref<8x1xf32, #tpu.memory_space<vmem>>, vector<8x1xf32>
      %16 = vector.broadcast %15 : vector<8x1xf32> to vector<8x256xf32>
      %17 = arith.addf %14, %16 : vector<8x256xf32>
      %cst_15 = arith.constant 0.000000e+00 : f32
      %18 = vector.broadcast %cst_15 : f32 to vector<8x256xf32>
      %19 = arith.maximumf %17, %18 : vector<8x256xf32>
      %20 = arith.truncf %19 : vector<8x256xf32> to vector<8x256xbf16>
      %c0_16 = arith.constant 0 : index
      %c0_17 = arith.constant 0 : index
      %c0_18 = arith.constant 0 : index
      %21 = vector.load %arg7[%c0_16, %c0_17, %c0_18] : memref<1x8x256xbf16, #tpu.memory_space<vmem>>, vector<1x8x256xbf16>
      %22 = vector.shape_cast %21 : vector<1x8x256xbf16> to vector<8x256xbf16>
      %23 = vector.shape_cast %20 : vector<8x256xbf16> to vector<1x8x256xbf16>
      tpu.vector_store %arg7[%c0_16, %c0_17, %c0_18], %23 {strides = array<i32>} : memref<1x8x256xbf16, #tpu.memory_space<vmem>>, vector<1x8x256xbf16>,
    } else {
    }
    return
  }
  func.func @transform_0(%arg0: i32, %arg1: i32, %arg2: i32, %arg3: i32) -> (i32, i32, i32) {
    %c0_i32 = arith.constant 0 : i32
    return %arg0, %arg3, %arg2 : i32, i32, i32
  }
  func.func @transform_1(%arg0: i32, %arg1: i32, %arg2: i32, %arg3: i32) -> (i32, i32) {
    %c0_i32 = arith.constant 0 : i32
    return %arg1, %arg3 : i32, i32
  }
  func.func @transform_2(%arg0: i32, %arg1: i32, %arg2: i32, %arg3: i32) -> (i32, i32) {
    %c0_i32 = arith.constant 0 : i32
    %c0_i32_0 = arith.constant 0 : i32
    return %arg1, %c0_i32 : i32, i32
  }
  func.func @transform_3(%arg0: i32, %arg1: i32, %arg2: i32, %arg3: i32) -> (i32, i32, i32) {
    %c0_i32 = arith.constant 0 : i32
    return %arg0, %arg1, %arg2 : i32, i32, i32
  }
}

</mosaic_0001>

<llo_original>
// kernel: bottleneck_forward.4
$region0: #{bottleneck_forward.4}
  #allocation0 [shape = 'u32[]', space=smem, size = 0x4, offset = 0x4, fixed_abs, tag = 'smem constant byte address 0x4 - core index']
  #allocation1 [shape = 'u32[144,128]{1,0:T(1,128)}', space=vmem, size = 0x12000, scoped, tag = 'internal scratch']
  %s0 = inlined_call_operand.vmem [shape: bf16[2,8,256], index: 0, kind: input, shape index: {}]
  %s1 = inlined_call_operand.vmem [shape: bf16[3,8,24], index: 1, kind: input, shape index: {}]
  %s2 = inlined_call_operand.vmem [shape: f32[8,1], index: 2, kind: input, shape index: {}]
  %s3 = inlined_call_operand.vmem [shape: bf16[2,8,256], index: 3, kind: output, shape index: {}]
  %s4 = sld [smem:[#allocation0]]
  $region45: #{bottleneck_forward.4} parent=0
    _
  %s6 = ssub.s32 1, %s4
  %s7 = scalar_select 0, %s6, %s4
  loop: start=0, step=1, limit=4
  $region2: #{bottleneck_forward.4} parent=0 // loop_pre_header
    _
  $region3: #{bottleneck_forward.4} parent=0 // loop_header
    %s9 = sphi 0, %s13
    %p10 = scmp.ge.s32.totalorder %s9, 4
    %s16 = sphi 0, %s28
    %s17 = sphi 0, %s24
    %s18 = sphi 0, %s16
    %s19 = sphi 0, %s17
    %s20 = sphi 0, %s18
    %s21 = sphi 0, %s19
    %s31 = sphi 0, %s33
    %s34 = sphi 0, %s31
    %s35 = sphi 0, %s34
    %s51 = sphi 0, %s35
    %s57 = sphi 0, %s59
    %s60 = sphi 0, %s57
    %s61 = sphi 0, %s60
    %s77 = sphi 0, %s61
    %s83 = sphi 0, %s85
    %s86 = sphi 0, %s83
    %s87 = sphi 0, %s86
    %s103 = sphi 0, %s87
    %s111 = sphi 0, %s113
    %s114 = sphi 0, %s111
    %s115 = sphi 0, %s114
    %s131 = sphi 0, %s115
  $region4: #{bottleneck_forward.4} parent=0 // loop_header_branch
    %12 = sbr.rel (%p10) target = $region8
  $region5: #{bottleneck_forward.4} parent=0 // loop_body
    %s14 = ssub.s32 %s9, 1
    %s15 = ssub.s32 %s9, 2
    %s22 = sadd.s32 1, %s17
    %p23 = scmp.ge.s32.totalorder %s22, 1
    %s24 = scalar_select %p23, 0, %s22
    %s25 = sadd.s32 1, %s16
    %s26 = scalar_select %p23, %s25, %s16
    %p27 = scmp.ge.s32.totalorder %s26, 2
    %s28 = scalar_select %p27, 0, %s26
    %s29 = ssub.s32 %s16, %s28
    %p30 = scmp.eq.s32.totalorder %s29, 0
    %s32 = sadd.s32 %s31, 1
    %s33 = scalar_select %p30, %s31, %s32
    %p36 = pneg %p30
    %p37 = scmp.eq.s32.totalorder %s9, 1
    %p38 = por %p36, %p37
    %p39 = scmp.ne.s32.totalorder %s31, %s34
    %p40 = scmp.eq.s32.totalorder %s9, 0
    %p41 = por %p39, %p40
    %p42 = scmp.ne.s32.totalorder %s31, %s34
    %p43 = scmp.eq.s32.totalorder %s14, 1
    %p44 = por %p42, %p43
    %p45 = scmp.ne.s32.totalorder %s34, %s35
    %p46 = scmp.eq.s32.totalorder %s14, 0
    %p47 = por %p45, %p46
    %p48 = scmp.ne.s32.totalorder %s34, %s35
    %p49 = scmp.eq.s32.totalorder %s15, 1
    %p50 = por %p48, %p49
    %p52 = scmp.ne.s32.totalorder %s35, %s51
    %p53 = scmp.eq.s32.totalorder %s15, 0
    %p54 = por %p52, %p53
    %s55 = ssub.s32 %s17, %s24
    %p56 = scmp.eq.s32.totalorder %s55, 0
    %s58 = sadd.s32 %s57, 1
    %s59 = scalar_select %p56, %s57, %s58
    %p62 = pneg %p56
    %p63 = scmp.eq.s32.totalorder %s9, 1
    %p64 = por %p62, %p63
    %p65 = scmp.ne.s32.totalorder %s57, %s60
    %p66 = scmp.eq.s32.totalorder %s9, 0
    %p67 = por %p65, %p66
    %p68 = scmp.ne.s32.totalorder %s57, %s60
    %p69 = scmp.eq.s32.totalorder %s14, 1
    %p70 = por %p68, %p69
    %p71 = scmp.ne.s32.totalorder %s60, %s61
    %p72 = scmp.eq.s32.totalorder %s14, 0
    %p73 = por %p71, %p72
    %p74 = scmp.ne.s32.totalorder %s60, %s61
    %p75 = scmp.eq.s32.totalorder %s15, 1
    %p76 = por %p74, %p75
    %p78 = scmp.ne.s32.totalorder %s61, %s77
    %p79 = scmp.eq.s32.totalorder %s15, 0
    %p80 = por %p78, %p79
    %s81 = ssub.s32 %s17, %s24
    %p82 = scmp.eq.s32.totalorder %s81, 0
    %s84 = sadd.s32 %s83, 1
    %s85 = scalar_select %p82, %s83, %s84
    %p88 = pneg %p82
    %p89 = scmp.eq.s32.totalorder %s9, 1
    %p90 = por %p88, %p89
    %p91 = scmp.ne.s32.totalorder %s83, %s86
    %p92 = scmp.eq.s32.totalorder %s9, 0
    %p93 = por %p91, %p92
    %p94 = scmp.ne.s32.totalorder %s83, %s86
    %p95 = scmp.eq.s32.totalorder %s14, 1
    %p96 = por %p94, %p95
    %p97 = scmp.ne.s32.totalorder %s86, %s87
    %p98 = scmp.eq.s32.totalorder %s14, 0
    %p99 = por %p97, %p98
    %p100 = scmp.ne.s32.totalorder %s86, %s87
    %p101 = scmp.eq.s32.totalorder %s15, 1
    %p102 = por %p100, %p101
    %p104 = scmp.ne.s32.totalorder %s87, %s103
    %p105 = scmp.eq.s32.totalorder %s15, 0
    %p106 = por %p104, %p105
    %s107 = ssub.s32 %s16, %s28
    %s108 = ssub.s32 %s17, %s24
    %s109 = sor.u32 %s107, %s108
    %p110 = scmp.eq.s32.totalorder %s109, 0
    %s112 = sadd.s32 %s111, 1
    %s113 = scalar_select %p110, %s111, %s112
    %p116 = pneg %p110
    %p117 = scmp.eq.s32.totalorder %s9, 1
    %p118 = por %p116, %p117
    %p119 = scmp.ne.s32.totalorder %s111, %s114
    %p120 = scmp.eq.s32.totalorder %s9, 0
    %p121 = por %p119, %p120
    %p122 = scmp.ne.s32.totalorder %s111, %s114
    %p123 = scmp.eq.s32.totalorder %s14, 1
    %p124 = por %p122, %p123
    %p125 = scmp.ne.s32.totalorder %s114, %s115
    %p126 = scmp.eq.s32.totalorder %s14, 0
    %p127 = por %p125, %p126
    %p128 = scmp.ne.s32.totalorder %s114, %s115
    %p129 = scmp.eq.s32.totalorder %s15, 1
    %p130 = por %p128, %p129
    %p132 = scmp.ne.s32.totalorder %s115, %s131
    %p133 = scmp.eq.s32.totalorder %s15, 0
    %p134 = por %p132, %p133
    %p135 = scmp.le.s32.totalorder 1, %s9
    %p136 = scmp.lt.s32.totalorder %s9, 3
    %p137 = pnand %p135, %p136
    %p138 = pneg %p137
    // Predicated region
    $region9: #{bottleneck_forward.4} parent=5 // pred_check
      _
    $region10: #{bottleneck_forward.4} parent=5 // pred_check_branch
      %140 = sbr.rel (%p137) target = $region12
    $region11: #{bottleneck_forward.4} parent=5 // pred_region
      %s141 = ssub.s32 %s9, 1
      // Predicated region
      $region13: #{bottleneck_forward.4} parent=11 // pred_check
        %p142 = pneg %p73
      $region14: #{bottleneck_forward.4} parent=11 // pred_check_branch
        %144 = sbr.rel (%p142) target = $region16
      $region15: #{bottleneck_forward.4} parent=11 // pred_region
        %p145 = scmp.lt.s32.totalorder %s19, 0
        %s146 = scalar_select %p145, %s19, 0
        %s147 = smul.addr %s146, 4
        %s148 = scalar_lea.vmem %s1, %s147
      $region16: #{bottleneck_forward.4} parent=11 // pred_fallthru
        _
      // Predicated region
      $region17: #{bottleneck_forward.4} parent=11 // pred_check
        %p149 = pneg %p99
      $region18: #{bottleneck_forward.4} parent=11 // pred_check_branch
        %151 = sbr.rel (%p149) target = $region20
      $region19: #{bottleneck_forward.4} parent=11 // pred_region
        %p152 = scmp.lt.s32.totalorder %s19, 0
        %s153 = scalar_select %p152, %s19, 0
        %s154 = smul.addr %s153, 8
        %s155 = scalar_lea.vmem %s2, %s154
      $region20: #{bottleneck_forward.4} parent=11 // pred_fallthru
        _
    $region12: #{bottleneck_forward.4} parent=5 // pred_fallthru
      _
    %p156 = scmp.lt.s32.totalorder %s9, 2
    // Predicated region
    $region21: #{bottleneck_forward.4} parent=5 // pred_check
      %p157 = pneg %p156
    $region22: #{bottleneck_forward.4} parent=5 // pred_check_branch
      %159 = sbr.rel (%p157) target = $region24
    $region23: #{bottleneck_forward.4} parent=5 // pred_region
      // Predicated region
      $region25: #{bottleneck_forward.4} parent=23 // pred_check
        %p160 = pneg %p41
      $region26: #{bottleneck_forward.4} parent=23 // pred_check_branch
        %162 = sbr.rel (%p160) target = $region28
      $region27: #{bottleneck_forward.4} parent=23 // pred_region
        %p163 = scmp.lt.s32.totalorder %s16, 1
        %s164 = scalar_select %p163, %s16, 1
        %s165 = smul.addr %s164, 2
        %s166 = smul.addr %s165, 4
        %s167 = scalar_lea.vmem %s0, %s166
      $region28: #{bottleneck_forward.4} parent=23 // pred_fallthru
        _
    $region24: #{bottleneck_forward.4} parent=5 // pred_fallthru
      _
    %p168 = scmp.le.s32.totalorder 1, %s9
    %p169 = scmp.lt.s32.totalorder %s9, 3
    %p170 = pnand %p168, %p169
    %p171 = pneg %p170
    // Predicated region
    $region29: #{bottleneck_forward.4} parent=5 // pred_check
      _
    $region30: #{bottleneck_forward.4} parent=5 // pred_check_branch
      %173 = sbr.rel (%p170) target = $region32
    $region31: #{bottleneck_forward.4} parent=5 // pred_region
      %s174 = ssub.s32 %s9, 1
      %p175 = scmp.lt.s32.totalorder %s18, 1
      %s176 = scalar_select %p175, %s18, 1
      %s177 = smul.addr %s176, 2
      %s178 = smul.addr %s177, 4
      %s179 = scalar_lea.vmem %s0, %s178
      %p180 = pneg %p47
      %p181 = pneg %p44
      %p182 = scmp.lt.s32.totalorder %s19, 0
      %s183 = scalar_select %p182, %s19, 0
      %s184 = smul.addr %s183, 4
      %s185 = scalar_lea.vmem %s1, %s184
      %p186 = pneg %p73
      %p187 = pneg %p70
      %p188 = scmp.lt.s32.totalorder %s19, 0
      %s189 = scalar_select %p188, %s19, 0
      %s190 = smul.addr %s189, 8
      %s191 = scalar_lea.vmem %s2, %s190
      %p192 = pneg %p99
      %p193 = pneg %p96
      %p194 = pneg %p127
      %p195 = pneg %p124
      %p196 = scmp.lt.s32.totalorder %s18, 1
      %s197 = scalar_select %p196, %s18, 1
      %p198 = scmp.lt.s32.totalorder %s19, 0
      %s199 = scalar_select %p198, %s19, 0
      %s200 = smul.addr %s199, 2
      %s201 = smul.addr %s197, 2
      %s202 = sadd.s32 %s200, %s201
      %s203 = smul.addr %s202, 4
      %s204 = scalar_lea.vmem %s3, %s203
      %p205 = scmp.lt.s32.totalorder %s18, 1
      %s206 = scalar_select %p205, %s18, 1
      %s207 = smul.addr %s206, 2
      %s208 = smul.addr %s207, 4
      %s209 = scalar_lea.vmem %s0, %s208
      %p210 = scmp.lt.s32.totalorder %s19, 0
      %s211 = scalar_select %p210, %s19, 0
      %s212 = smul.addr %s211, 4
      %s213 = scalar_lea.vmem %s1, %s212
      %p214 = scmp.lt.s32.totalorder %s19, 0
      %s215 = scalar_select %p214, %s19, 0
      %s216 = smul.addr %s215, 8
      %s217 = scalar_lea.vmem %s2, %s216
      %p218 = scmp.lt.s32.totalorder %s18, 1
      %s219 = scalar_select %p218, %s18, 1
      %p220 = scmp.lt.s32.totalorder %s19, 0
      %s221 = scalar_select %p220, %s19, 0
      %s222 = smul.addr %s221, 2
      %s223 = smul.addr %s219, 2
      %s224 = sadd.s32 %s222, %s223
      %s225 = smul.addr %s224, 4
      %s226 = scalar_lea.vmem %s3, %s225
      %v230 = vld [vmem:[%s209] sm:$0xff]
      %v231 = vlaneseq
      %v232 = vand.u32 %v231, 127
      %v233 = vadd.s32 %v232, 128
      %vm234 = vcmp.lt.s32.totalorder %v232, 0
      %v235 = vsub.s32 0, %v232
      %v236 = vsel %vm234, %v235, %v232
      %v237 = vshrl.u32 %v236, 4
      %v238 = vand.u32 %v236, 15
      %v239 = vsub.s32 0, %v238
      %v240 = vsel %vm234, %v239, %v238
      %vm241 = vcmp.lt.s32.totalorder %v233, 0
      %v242 = vsub.s32 0, %v233
      %v243 = vsel %vm241, %v242, %v233
      %v244 = vshrl.u32 %v243, 4
      %v245 = vand.u32 %v243, 15
      %v246 = vsub.s32 0, %v245
      %v247 = vsel %vm241, %v246, %v245
      %vm248 = vcmp.ne.s32.totalorder %v240, 0
      %vm249 = vcmp.ne.s32.totalorder %v247, 0
      %vm250 = vcmp.lt.s32.totalorder %v240, 0
      %vm251 = vcmp.lt.s32.totalorder %v247, 0
      %vm252 = vmand %vm250, %vm248
      %vm253 = vmand %vm251, %vm249
      %v254 = vadd.s32 %v240, 16
      %v255 = vadd.s32 %v247, 16
      %v256 = vsel %vm252, %v254, %v240
      %v257 = vsel %vm253, %v255, %v247
      %vm258 = vcmp.eq.s32.totalorder %v256, 0
      %vm259 = vcmp.eq.s32.totalorder %v257, 0
      %v261 = vunpack.c.l.b16 %v230
      %v262 = vunpack.c.h.b16 %v230
      %v263 = vpack.c.b16 %v261, %v261
      %v264 = vpack.c.b16 %v262, %v262
      %265 = vrot.lane.b32.xlu0 %v263, 1
      %v266 = vpop.permute.xlu0 %265
      %267 = vrot.lane.b32.xlu0 %v264, 1
      %v268 = vpop.permute.xlu0 %267
      %vm269 = vcmask 7168
      %v270 = vsel %vm269, %v266, %v268
      %vm272 = vcmask 7168
      %v275 = vsel %vm272, 0, %v266
      %v277 = vsel %vm258, 1, 0
      %v278 = vsel %vm259, 1, 0
      %vm279 = vcmp.eq.s32.totalorder %v277, 1
      %vm280 = vcmp.eq.s32.totalorder %v278, 1
      %vm281 = vmpackc.low %vm280, %vm279
      %v282 = vsel %vm281, 65537, 0
      %v283 = vlaneseq
      %v284 = vshrl.u32 %v283, 7
      %v285 = vsub.s32 0, %v284
      %v286 = vrot.slane %v282, %v285
      %v287 = vlaneseq
      %v288 = vshrl.u32 %v287, 7
      %v289 = vsub.s32 4, %v288
      %v290 = vrot.slane %v282, %v289
      %vm291 = vcmp.ne.s16.totalorder %v286, 0
      %vm292 = vcmp.ne.s16.totalorder %v290, 0
      %v293 = vsel %vm291, 0, %v275
      %v294 = vsel %vm292, 0, %v270
      %vm295 = vcmp.eq.s32.totalorder %v256, 15
      %vm296 = vcmp.eq.s32.totalorder %v257, 15
      %297 = vrot.lane.b32.xlu0 %v263, 127
      %v298 = vpop.permute.xlu0 %297
      %299 = vrot.lane.b32.xlu0 %v264, 127
      %v300 = vpop.permute.xlu0 %299
      %vm301 = vcmask 1039360
      %v302 = vsel %vm301, %v298, %v300
      %vm304 = vcmask 1039360
      %v306 = vsel %vm304, %v300, 0
      %v308 = vsel %vm295, 1, 0
      %v309 = vsel %vm296, 1, 0
      %vm310 = vcmp.eq.s32.totalorder %v308, 1
      %vm311 = vcmp.eq.s32.totalorder %v309, 1
      %vm312 = vmpackc.low %vm311, %vm310
      %v313 = vsel %vm312, 65537, 0
      %v314 = vlaneseq
      %v315 = vshrl.u32 %v314, 7
      %v316 = vsub.s32 0, %v315
      %v317 = vrot.slane %v313, %v316
      %v318 = vlaneseq
      %v319 = vshrl.u32 %v318, 7
      %v320 = vsub.s32 4, %v319
      %v321 = vrot.slane %v313, %v320
      %vm322 = vcmp.ne.s16.totalorder %v317, 0
      %vm323 = vcmp.ne.s16.totalorder %v321, 0
      %v324 = vsel %vm322, 0, %v302
      %v325 = vsel %vm323, 0, %v306
      %vm326 = vcmask 1043456
      %v329 = vsel %vm326, %v293, %v263
      %v333 = vsel %vm326, %v294, %v264
      %v335 = vld [vmem:[%s213] sm:$0xf]
      %vm336 = vcmask 195584
      %v338 = vsel %vm336, %v335, 0
      %v341 = vsel %vm326, %v324, 0
      %v344 = vsel %vm326, %v325, 0
      %346 = vmatprep.subr.bf16.mxu0 %v333
      %347 = vmatpush1.bf16.msra.mxu0 %v329
      %348 = vmatprep.subr.bf16.mxu0 %v344
      %349 = vmatpush1.bf16.msra.mxu0 %v341
      %350 = vmatprep.subr.bf16.mxu0 0
      %351 = vmatpush1.bf16.msra.mxu0 0
      %352 = vmatprep.subr.bf16.mxu0 0
      %353 = vmatpush1.bf16.msra.mxu0 0
      %354 = vmatprep.subr.bf16.mxu0 0
      %355 = vmatpush1.bf16.msra.mxu0 0
      %356 = vmatprep.subr.bf16.mxu0 0
      %357 = vmatpush1.bf16.msra.mxu0 0
      %358 = vmatprep.subr.bf16.mxu0 0
      %359 = vmatpush1.bf16.msra.mxu0 0
      %360 = vmatprep.subr.bf16.mxu0 0
      %361 = vmatpush1.bf16.msra.mxu0 0
      %362 = vmatprep.subr.bf16.mxu0 0
      %363 = vmatpush1.bf16.msra.mxu0 0
      %364 = vmatprep.subr.bf16.mxu0 0
      %365 = vmatpush1.bf16.msra.mxu0 0
      %366 = vmatprep.subr.bf16.mxu0 0
      %367 = vmatpush1.bf16.msra.mxu0 0
      %368 = vmatprep.subr.bf16.mxu0 0
      %369 = vmatpush1.bf16.msra.mxu0 0
      %370 = vmatprep.subr.bf16.mxu0 0
      %371 = vmatpush1.bf16.msra.mxu0 0
      %372 = vmatprep.subr.bf16.mxu0 0
      %373 = vmatpush1.bf16.msra.mxu0 0
      %374 = vmatprep.subr.bf16.mxu0 0
      %375 = vmatpush1.bf16.msra.mxu0 0
      %376 = vmatprep.subr.bf16.mxu0 0
      %377 = vmatpush1.bf16.msra.mxu0 0
      %378 = vmatprep.mubr.bf16.mxu0 0
      %379 = vmatmul.mubr.bf16.gmra.mrb[0].mxu0 %v338
      %v380 = vpop.f32.mrb[0].mxu0
      %v381 = vadd.f32 0.0, %v380
      %v382 = vpop.f32.mrb[0].mxu0
      %v383 = vadd.f32 0.0, %v382
      %v384 = vpop.f32.mrb[0].mxu0
      %v385 = vpop.f32.mrb[0].mxu0
      %386 = vdwg.mxu0
      %s387 = scalar_lea.vmem %s213, 4
      %v388 = vld [vmem:[%s387] sm:$0xf]
      %s389 = scalar_lea.vmem %s213, 8
      %v390 = vld [vmem:[%s389] sm:$0xf]
      %v392 = vsel %vm336, %v390, 0
      %394 = vmatprep.subr.bf16.mxu0 %v333
      %395 = vmatpush1.bf16.msra.mxu0 %v329
      %396 = vmatprep.subr.bf16.mxu0 %v344
      %397 = vmatpush1.bf16.msra.mxu0 %v341
      %398 = vmatprep.subr.bf16.mxu0 0
      %399 = vmatpush1.bf16.msra.mxu0 0
      %400 = vmatprep.subr.bf16.mxu0 0
      %401 = vmatpush1.bf16.msra.mxu0 0
      %402 = vmatprep.subr.bf16.mxu0 0
      %403 = vmatpush1.bf16.msra.mxu0 0
      %404 = vmatprep.subr.bf16.mxu0 0
      %405 = vmatpush1.bf16.msra.mxu0 0
      %406 = vmatprep.subr.bf16.mxu0 0
      %407 = vmatpush1.bf16.msra.mxu0 0
      %408 = vmatprep.subr.bf16.mxu0 0
      %409 = vmatpush1.bf16.msra.mxu0 0
      %410 = vmatprep.subr.bf16.mxu0 0
      %411 = vmatpush1.bf16.msra.mxu0 0
      %412 = vmatprep.subr.bf16.mxu0 0
      %413 = vmatpush1.bf16.msra.mxu0 0
      %414 = vmatprep.subr.bf16.mxu0 0
      %415 = vmatpush1.bf16.msra.mxu0 0
      %416 = vmatprep.subr.bf16.mxu0 0
      %417 = vmatpush1.bf16.msra.mxu0 0
      %418 = vmatprep.subr.bf16.mxu0 0
      %419 = vmatpush1.bf16.msra.mxu0 0
      %420 = vmatprep.subr.bf16.mxu0 0
      %421 = vmatpush1.bf16.msra.mxu0 0
      %422 = vmatprep.subr.bf16.mxu0 0
      %423 = vmatpush1.bf16.msra.mxu0 0
      %424 = vmatprep.subr.bf16.mxu0 0
      %425 = vmatpush1.bf16.msra.mxu0 0
      %426 = vmatprep.mubr.bf16.mxu0 0
      %427 = vmatmul.mubr.bf16.gmra.mrb[0].mxu0 %v392
      %v428 = vpop.f32.mrb[0].mxu0
      %v429 = vadd.f32 0.0, %v428
      %v430 = vpop.f32.mrb[0].mxu0
      %v431 = vadd.f32 0.0, %v430
      %v432 = vpop.f32.mrb[0].mxu0
      %v433 = vpop.f32.mrb[0].mxu0
      %434 = vdwg.mxu0
      %437 = vrot.lane.b32.xlu0 %v381, 16
      %v438 = vpop.permute.xlu0 %437
      %439 = vrot.lane.b32.xlu0 %v383, 16
      %v440 = vpop.permute.xlu0 %439
      %vm441 = vcmask 130048
      %v442 = vsel %vm441, %v438, %v440
      %v445 = vsel %vm441, 0.0, %v438
      %v447 = vsel %vm336, %v388, 0
      %449 = vmatprep.subr.bf16.mxu0 %v333
      %450 = vmatpush1.bf16.msra.mxu0 %v329
      %451 = vmatprep.subr.bf16.mxu0 %v344
      %452 = vmatpush1.bf16.msra.mxu0 %v341
      %453 = vmatprep.subr.bf16.mxu0 0
      %454 = vmatpush1.bf16.msra.mxu0 0
      %455 = vmatprep.subr.bf16.mxu0 0
      %456 = vmatpush1.bf16.msra.mxu0 0
      %457 = vmatprep.subr.bf16.mxu0 0
      %458 = vmatpush1.bf16.msra.mxu0 0
      %459 = vmatprep.subr.bf16.mxu0 0
      %460 = vmatpush1.bf16.msra.mxu0 0
      %461 = vmatprep.subr.bf16.mxu0 0
      %462 = vmatpush1.bf16.msra.mxu0 0
      %463 = vmatprep.subr.bf16.mxu0 0
      %464 = vmatpush1.bf16.msra.mxu0 0
      %465 = vmatprep.subr.bf16.mxu0 0
      %466 = vmatpush1.bf16.msra.mxu0 0
      %467 = vmatprep.subr.bf16.mxu0 0
      %468 = vmatpush1.bf16.msra.mxu0 0
      %469 = vmatprep.subr.bf16.mxu0 0
      %470 = vmatpush1.bf16.msra.mxu0 0
      %471 = vmatprep.subr.bf16.mxu0 0
      %472 = vmatpush1.bf16.msra.mxu0 0
      %473 = vmatprep.subr.bf16.mxu0 0
      %474 = vmatpush1.bf16.msra.mxu0 0
      %475 = vmatprep.subr.bf16.mxu0 0
      %476 = vmatpush1.bf16.msra.mxu0 0
      %477 = vmatprep.subr.bf16.mxu0 0
      %478 = vmatpush1.bf16.msra.mxu0 0
      %479 = vmatprep.subr.bf16.mxu0 0
      %480 = vmatpush1.bf16.msra.mxu0 0
      %481 = vmatprep.mubr.bf16.mxu0 0
      %482 = vmatmul.mubr.bf16.gmra.mrb[0].mxu0 %v447
      %v483 = vpop.f32.mrb[0].mxu0
      %v484 = vadd.f32 %v445, %v483
      %v485 = vpop.f32.mrb[0].mxu0
      %v486 = vadd.f32 %v442, %v485
      %v487 = vpop.f32.mrb[0].mxu0
      %v488 = vpop.f32.mrb[0].mxu0
      %489 = vdwg.mxu0
      %492 = vrot.lane.b32.xlu0 %v429, 112
      %v493 = vpop.permute.xlu0 %492
      %494 = vrot.lane.b32.xlu0 %v431, 112
      %v495 = vpop.permute.xlu0 %494
      %vm496 = vcmask 916480
      %v497 = vsel %vm496, %v493, %v495
      %v500 = vsel %vm496, %v495, 0.0
      %v501 = vadd.f32 %v484, %v497
      %v502 = vadd.f32 %v486, %v500
      %v503 = vld [vmem:[%s217] sm:$0xff]
      %505 = vset.pattern.permute.xlu0 0
      %506 = vperm.xlu0 %505, %v503
      %v507 = vpop.permute.xlu0 %506
      %v509 = vadd.f32 %v501, %v507
      %v510 = vadd.f32 %v502, %v507
      %v511 = vmax.f32 %v509, 0.0
      %v512 = vmax.f32 %v510, 0.0
      %v513 = vpack.c.bf16 %v511, %v511
      %v514 = vpack.c.bf16 %v512, %v512
      %v517 = vunpack.c.l.b16 %v513
      %v518 = vunpack.c.l.b16 %v514
      %v519 = vpack.c.b16 %v518, %v517
      %521 = vst [vmem:[%s226] sm:$0xff] %v519
      %p522 = scmp.lt.s32.totalorder %s18, 1
      %s523 = scalar_select %p522, %s18, 1
      %p524 = scmp.lt.s32.totalorder %s19, 0
      %s525 = scalar_select %p524, %s19, 0
      %s526 = smul.addr %s525, 2
      %s527 = smul.addr %s523, 2
      %s528 = sadd.s32 %s526, %s527
      %s529 = smul.addr %s528, 4
      %s530 = scalar_lea.vmem %s3, %s529
      // Predicated region
      $region33: #{bottleneck_forward.4} parent=31 // pred_check
        %p531 = pneg %p124
      $region34: #{bottleneck_forward.4} parent=31 // pred_check_branch
        %533 = sbr.rel (%p531) target = $region36
      $region35: #{bottleneck_forward.4} parent=31 // pred_region
        _
      $region36: #{bottleneck_forward.4} parent=31 // pred_fallthru
        _
    $region32: #{bottleneck_forward.4} parent=5 // pred_fallthru
      _
    %p534 = scmp.le.s32.totalorder 2, %s9
    // Predicated region
    $region37: #{bottleneck_forward.4} parent=5 // pred_check
      %p535 = pneg %p534
    $region38: #{bottleneck_forward.4} parent=5 // pred_check_branch
      %537 = sbr.rel (%p535) target = $region40
    $region39: #{bottleneck_forward.4} parent=5 // pred_region
      %s538 = ssub.s32 %s9, 2
      // Predicated region
      $region41: #{bottleneck_forward.4} parent=39 // pred_check
        %p539 = pneg %p130
      $region42: #{bottleneck_forward.4} parent=39 // pred_check_branch
        %541 = sbr.rel (%p539) target = $region44
      $region43: #{bottleneck_forward.4} parent=39 // pred_region
        %p542 = scmp.lt.s32.totalorder %s20, 1
        %s543 = scalar_select %p542, %s20, 1
        %p544 = scmp.lt.s32.totalorder %s21, 0
        %s545 = scalar_select %p544, %s21, 0
        %s546 = smul.addr %s545, 2
        %s547 = smul.addr %s543, 2
        %s548 = sadd.s32 %s546, %s547
        %s549 = smul.addr %s548, 4
        %s550 = scalar_lea.vmem %s3, %s549
      $region44: #{bottleneck_forward.4} parent=39 // pred_fallthru
        _
    $region40: #{bottleneck_forward.4} parent=5 // pred_fallthru
      _
  $region6: #{bottleneck_forward.4} parent=0 // loop_footer
    %s13 = sadd.s32 1, %s9
  $region7: #{bottleneck_forward.4} parent=0 // loop_footer_branch
    %8 = sbr.rel target = $region3
  $region8: #{bottleneck_forward.4} parent=0 // loop_exit
    _

// kernel: bottleneck_forward.5
$region0: #{bottleneck_forward.5}
  #allocation0 [shape = 'u32[]', space=smem, size = 0x4, offset = 0x4, fixed_abs, tag = 'smem constant byte address 0x4 - core index']
  #allocation1 [shape = 'u32[144,128]{1,0:T(1,128)}', space=vmem, size = 0x12000, scoped, tag = 'internal scratch']
  #allocation2 [shape = 'f32[32,256]{1,0:T(8,128)}', space=vmem, size = 0x8000, scoped, tag = 'scratch operand']
  %s0 = inlined_call_operand.vmem [shape: bf16[2,8,256], index: 0, kind: input, shape index: {}]
  %s1 = inlined_call_operand.vmem [shape: bf16[32,8], index: 1, kind: input, shape index: {}]
  %s2 = inlined_call_operand.vmem [shape: f32[32,1], index: 2, kind: input, shape index: {}]
  %s3 = inlined_call_operand.vmem [shape: f32[2,32,256], index: 3, kind: input, shape index: {}]
  %s4 = inlined_call_operand.vmem [shape: f32[2,32,256], index: 4, kind: output, shape index: {}]
  %s5 = sld [smem:[#allocation0]]
  $region57: #{bottleneck_forward.5} parent=0
    _
  %s7 = ssub.s32 1, %s5
  %s8 = scalar_select 0, %s7, %s5
  loop: start=0, step=1, limit=4
  $region2: #{bottleneck_forward.5} parent=0 // loop_pre_header
    _
  $region3: #{bottleneck_forward.5} parent=0 // loop_header
    %s10 = sphi 0, %s14
    %p11 = scmp.ge.s32.totalorder %s10, 4
    %s17 = sphi 0, %s43
    %s18 = sphi 0, %s39
    %s19 = sphi 0, %s35
    %s20 = sphi 0, %s31
    %s21 = sphi 0, %s17
    %s22 = sphi 0, %s18
    %s23 = sphi 0, %s19
    %s24 = sphi 0, %s20
    %s25 = sphi 0, %s21
    %s26 = sphi 0, %s22
    %s27 = sphi 0, %s23
    %s28 = sphi 0, %s24
    %s50 = sphi 0, %s52
    %s53 = sphi 0, %s50
    %s54 = sphi 0, %s53
    %s70 = sphi 0, %s54
    %s78 = sphi 0, %s80
    %s81 = sphi 0, %s78
    %s82 = sphi 0, %s81
    %s98 = sphi 0, %s82
    %s104 = sphi 0, %s106
    %s107 = sphi 0, %s104
    %s108 = sphi 0, %s107
    %s124 = sphi 0, %s108
    %s134 = sphi 0, %s136
    %s137 = sphi 0, %s134
    %s138 = sphi 0, %s137
    %s154 = sphi 0, %s138
    %s164 = sphi 0, %s166
    %s167 = sphi 0, %s164
    %s168 = sphi 0, %s167
    %s184 = sphi 0, %s168
  $region4: #{bottleneck_forward.5} parent=0 // loop_header_branch
    %13 = sbr.rel (%p11) target = $region8
  $region5: #{bottleneck_forward.5} parent=0 // loop_body
    %s15 = ssub.s32 %s10, 1
    %s16 = ssub.s32 %s10, 2
    %s29 = sadd.s32 1, %s20
    %p30 = scmp.ge.s32.totalorder %s29, 1
    %s31 = scalar_select %p30, 0, %s29
    %s32 = sadd.s32 1, %s19
    %s33 = scalar_select %p30, %s32, %s19
    %p34 = scmp.ge.s32.totalorder %s33, 1
    %s35 = scalar_select %p34, 0, %s33
    %s36 = sadd.s32 1, %s18
    %s37 = scalar_select %p34, %s36, %s18
    %p38 = scmp.ge.s32.totalorder %s37, 1
    %s39 = scalar_select %p38, 0, %s37
    %s40 = sadd.s32 1, %s17
    %s41 = scalar_select %p38, %s40, %s17
    %p42 = scmp.ge.s32.totalorder %s41, 2
    %s43 = scalar_select %p42, 0, %s41
    %s44 = ssub.s32 %s17, %s43
    %s45 = ssub.s32 %s20, %s31
    %s46 = sor.u32 %s44, %s45
    %s47 = ssub.s32 %s19, %s35
    %s48 = sor.u32 %s46, %s47
    %p49 = scmp.eq.s32.totalorder %s48, 0
    %s51 = sadd.s32 %s50, 1
    %s52 = scalar_select %p49, %s50, %s51
    %p55 = pneg %p49
    %p56 = scmp.eq.s32.totalorder %s10, 1
    %p57 = por %p55, %p56
    %p58 = scmp.ne.s32.totalorder %s50, %s53
    %p59 = scmp.eq.s32.totalorder %s10, 0
    %p60 = por %p58, %p59
    %p61 = scmp.ne.s32.totalorder %s50, %s53
    %p62 = scmp.eq.s32.totalorder %s15, 1
    %p63 = por %p61, %p62
    %p64 = scmp.ne.s32.totalorder %s53, %s54
    %p65 = scmp.eq.s32.totalorder %s15, 0
    %p66 = por %p64, %p65
    %p67 = scmp.ne.s32.totalorder %s53, %s54
    %p68 = scmp.eq.s32.totalorder %s16, 1
    %p69 = por %p67, %p68
    %p71 = scmp.ne.s32.totalorder %s54, %s70
    %p72 = scmp.eq.s32.totalorder %s16, 0
    %p73 = por %p71, %p72
    %s74 = ssub.s32 %s18, %s39
    %s75 = ssub.s32 %s20, %s31
    %s76 = sor.u32 %s74, %s75
    %p77 = scmp.eq.s32.totalorder %s76, 0
    %s79 = sadd.s32 %s78, 1
    %s80 = scalar_select %p77, %s78, %s79
    %p83 = pneg %p77
    %p84 = scmp.eq.s32.totalorder %s10, 1
    %p85 = por %p83, %p84
    %p86 = scmp.ne.s32.totalorder %s78, %s81
    %p87 = scmp.eq.s32.totalorder %s10, 0
    %p88 = por %p86, %p87
    %p89 = scmp.ne.s32.totalorder %s78, %s81
    %p90 = scmp.eq.s32.totalorder %s15, 1
    %p91 = por %p89, %p90
    %p92 = scmp.ne.s32.totalorder %s81, %s82
    %p93 = scmp.eq.s32.totalorder %s15, 0
    %p94 = por %p92, %p93
    %p95 = scmp.ne.s32.totalorder %s81, %s82
    %p96 = scmp.eq.s32.totalorder %s16, 1
    %p97 = por %p95, %p96
    %p99 = scmp.ne.s32.totalorder %s82, %s98
    %p100 = scmp.eq.s32.totalorder %s16, 0
    %p101 = por %p99, %p100
    %s102 = ssub.s32 %s18, %s39
    %p103 = scmp.eq.s32.totalorder %s102, 0
    %s105 = sadd.s32 %s104, 1
    %s106 = scalar_select %p103, %s104, %s105
    %p109 = pneg %p103
    %p110 = scmp.eq.s32.totalorder %s10, 1
    %p111 = por %p109, %p110
    %p112 = scmp.ne.s32.totalorder %s104, %s107
    %p113 = scmp.eq.s32.totalorder %s10, 0
    %p114 = por %p112, %p113
    %p115 = scmp.ne.s32.totalorder %s104, %s107
    %p116 = scmp.eq.s32.totalorder %s15, 1
    %p117 = por %p115, %p116
    %p118 = scmp.ne.s32.totalorder %s107, %s108
    %p119 = scmp.eq.s32.totalorder %s15, 0
    %p120 = por %p118, %p119
    %p121 = scmp.ne.s32.totalorder %s107, %s108
    %p122 = scmp.eq.s32.totalorder %s16, 1
    %p123 = por %p121, %p122
    %p125 = scmp.ne.s32.totalorder %s108, %s124
    %p126 = scmp.eq.s32.totalorder %s16, 0
    %p127 = por %p125, %p126
    %s128 = ssub.s32 %s17, %s43
    %s129 = ssub.s32 %s18, %s39
    %s130 = sor.u32 %s128, %s129
    %s131 = ssub.s32 %s19, %s35
    %s132 = sor.u32 %s130, %s131
    %p133 = scmp.eq.s32.totalorder %s132, 0
    %s135 = sadd.s32 %s134, 1
    %s136 = scalar_select %p133, %s134, %s135
    %p139 = pneg %p133
    %p140 = scmp.eq.s32.totalorder %s10, 1
    %p141 = por %p139, %p140
    %p142 = scmp.ne.s32.totalorder %s134, %s137
    %p143 = scmp.eq.s32.totalorder %s10, 0
    %p144 = por %p142, %p143
    %p145 = scmp.ne.s32.totalorder %s134, %s137
    %p146 = scmp.eq.s32.totalorder %s15, 1
    %p147 = por %p145, %p146
    %p148 = scmp.ne.s32.totalorder %s137, %s138
    %p149 = scmp.eq.s32.totalorder %s15, 0
    %p150 = por %p148, %p149
    %p151 = scmp.ne.s32.totalorder %s137, %s138
    %p152 = scmp.eq.s32.totalorder %s16, 1
    %p153 = por %p151, %p152
    %p155 = scmp.ne.s32.totalorder %s138, %s154
    %p156 = scmp.eq.s32.totalorder %s16, 0
    %p157 = por %p155, %p156
    %s158 = ssub.s32 %s17, %s43
    %s159 = ssub.s32 %s18, %s39
    %s160 = sor.u32 %s158, %s159
    %s161 = ssub.s32 %s19, %s35
    %s162 = sor.u32 %s160, %s161
    %p163 = scmp.eq.s32.totalorder %s162, 0
    %s165 = sadd.s32 %s164, 1
    %s166 = scalar_select %p163, %s164, %s165
    %p169 = pneg %p163
    %p170 = scmp.eq.s32.totalorder %s10, 1
    %p171 = por %p169, %p170
    %p172 = scmp.ne.s32.totalorder %s164, %s167
    %p173 = scmp.eq.s32.totalorder %s10, 0
    %p174 = por %p172, %p173
    %p175 = scmp.ne.s32.totalorder %s164, %s167
    %p176 = scmp.eq.s32.totalorder %s15, 1
    %p177 = por %p175, %p176
    %p178 = scmp.ne.s32.totalorder %s167, %s168
    %p179 = scmp.eq.s32.totalorder %s15, 0
    %p180 = por %p178, %p179
    %p181 = scmp.ne.s32.totalorder %s167, %s168
    %p182 = scmp.eq.s32.totalorder %s16, 1
    %p183 = por %p181, %p182
    %p185 = scmp.ne.s32.totalorder %s168, %s184
    %p186 = scmp.eq.s32.totalorder %s16, 0
    %p187 = por %p185, %p186
    %p188 = scmp.le.s32.totalorder 1, %s10
    %p189 = scmp.lt.s32.totalorder %s10, 3
    %p190 = pnand %p188, %p189
    %p191 = pneg %p190
    // Predicated region
    $region9: #{bottleneck_forward.5} parent=5 // pred_check
      _
    $region10: #{bottleneck_forward.5} parent=5 // pred_check_branch
      %193 = sbr.rel (%p190) target = $region12
    $region11: #{bottleneck_forward.5} parent=5 // pred_region
      %s194 = ssub.s32 %s10, 1
      // Predicated region
      $region13: #{bottleneck_forward.5} parent=11 // pred_check
        %p195 = pneg %p94
      $region14: #{bottleneck_forward.5} parent=11 // pred_check_branch
        %197 = sbr.rel (%p195) target = $region16
      $region15: #{bottleneck_forward.5} parent=11 // pred_region
        %s198 = smul.u32 4, %s22
        %p199 = scmp.lt.s32.totalorder %s198, 3
        %s200 = scalar_select %p199, %s198, 3
        %p201 = scmp.lt.s32.totalorder %s24, 0
        %s202 = scalar_select %p201, %s24, 0
        %s203 = sadd.s32 %s202, %s200
        %s204 = smul.addr %s203, 4
        %s205 = scalar_lea.vmem %s1, %s204
        %s206 = smul.u32 4, %s22
      $region16: #{bottleneck_forward.5} parent=11 // pred_fallthru
        _
      // Predicated region
      $region17: #{bottleneck_forward.5} parent=11 // pred_check
        %p207 = pneg %p120
      $region18: #{bottleneck_forward.5} parent=11 // pred_check_branch
        %209 = sbr.rel (%p207) target = $region20
      $region19: #{bottleneck_forward.5} parent=11 // pred_region
        %s210 = smul.u32 4, %s22
        %p211 = scmp.lt.s32.totalorder %s210, 3
        %s212 = scalar_select %p211, %s210, 3
        %s213 = smul.addr %s212, 8
        %s214 = scalar_lea.vmem %s2, %s213
        %s215 = smul.u32 4, %s22
      $region20: #{bottleneck_forward.5} parent=11 // pred_fallthru
        _
    $region12: #{bottleneck_forward.5} parent=5 // pred_fallthru
      _
    %p216 = scmp.lt.s32.totalorder %s10, 2
    // Predicated region
    $region21: #{bottleneck_forward.5} parent=5 // pred_check
      %p217 = pneg %p216
    $region22: #{bottleneck_forward.5} parent=5 // pred_check_branch
      %219 = sbr.rel (%p217) target = $region24
    $region23: #{bottleneck_forward.5} parent=5 // pred_region
      // Predicated region
      $region25: #{bottleneck_forward.5} parent=23 // pred_check
        %p220 = pneg %p60
      $region26: #{bottleneck_forward.5} parent=23 // pred_check_branch
        %222 = sbr.rel (%p220) target = $region28
      $region27: #{bottleneck_forward.5} parent=23 // pred_region
        %s223 = smul.u32 2, %s19
        %p224 = scmp.lt.s32.totalorder %s17, 1
        %s225 = scalar_select %p224, %s17, 1
        %p226 = scmp.lt.s32.totalorder %s20, 0
        %s227 = scalar_select %p226, %s20, 0
        %p228 = scmp.lt.s32.totalorder %s223, 1
        %s229 = scalar_select %p228, %s223, 1
        %s230 = smul.addr %s227, 2
        %s231 = sadd.s32 %s229, %s230
        %s232 = smul.addr %s225, 2
        %s233 = sadd.s32 %s231, %s232
        %s234 = smul.addr %s233, 4
        %s235 = scalar_lea.vmem %s0, %s234
        %s236 = smul.u32 2, %s19
      $region28: #{bottleneck_forward.5} parent=23 // pred_fallthru
        _
      // Predicated region
      $region29: #{bottleneck_forward.5} parent=23 // pred_check
        %p237 = pneg %p144
      $region30: #{bottleneck_forward.5} parent=23 // pred_check_branch
        %239 = sbr.rel (%p237) target = $region32
      $region31: #{bottleneck_forward.5} parent=23 // pred_region
        %s240 = smul.u32 4, %s18
        %s241 = smul.u32 2, %s19
        %p242 = scmp.lt.s32.totalorder %s17, 1
        %s243 = scalar_select %p242, %s17, 1
        %p244 = scmp.lt.s32.totalorder %s240, 3
        %s245 = scalar_select %p244, %s240, 3
        %p246 = scmp.lt.s32.totalorder %s241, 1
        %s247 = scalar_select %p246, %s241, 1
        %s248 = smul.addr %s245, 2
        %s249 = sadd.s32 %s247, %s248
        %s250 = smul.addr %s243, 8
        %s251 = sadd.s32 %s249, %s250
        %s252 = smul.addr %s251, 8
        %s253 = scalar_lea.vmem %s3, %s252
        %s254 = smul.u32 4, %s18
        %s255 = smul.u32 2, %s19
      $region32: #{bottleneck_forward.5} parent=23 // pred_fallthru
        _
    $region24: #{bottleneck_forward.5} parent=5 // pred_fallthru
      _
    %p256 = scmp.le.s32.totalorder 1, %s10
    %p257 = scmp.lt.s32.totalorder %s10, 3
    %p258 = pnand %p256, %p257
    %p259 = pneg %p258
    // Predicated region
    $region33: #{bottleneck_forward.5} parent=5 // pred_check
      _
    $region34: #{bottleneck_forward.5} parent=5 // pred_check_branch
      %261 = sbr.rel (%p258) target = $region36
    $region35: #{bottleneck_forward.5} parent=5 // pred_region
      %s262 = ssub.s32 %s10, 1
      %s263 = smul.u32 2, %s23
      %p264 = scmp.lt.s32.totalorder %s21, 1
      %s265 = scalar_select %p264, %s21, 1
      %p266 = scmp.lt.s32.totalorder %s24, 0
      %s267 = scalar_select %p266, %s24, 0
      %p268 = scmp.lt.s32.totalorder %s263, 1
      %s269 = scalar_select %p268, %s263, 1
      %s270 = smul.addr %s267, 2
      %s271 = sadd.s32 %s269, %s270
      %s272 = smul.addr %s265, 2
      %s273 = sadd.s32 %s271, %s272
      %s274 = smul.addr %s273, 4
      %s275 = scalar_lea.vmem %s0, %s274
      %p276 = pneg %p66
      %p277 = pneg %p63
      %s278 = smul.u32 4, %s22
      %p279 = scmp.lt.s32.totalorder %s278, 3
      %s280 = scalar_select %p279, %s278, 3
      %p281 = scmp.lt.s32.totalorder %s24, 0
      %s282 = scalar_select %p281, %s24, 0
      %s283 = sadd.s32 %s282, %s280
      %s284 = smul.addr %s283, 4
      %s285 = scalar_lea.vmem %s1, %s284
      %p286 = pneg %p94
      %p287 = pneg %p91
      %s288 = smul.u32 4, %s22
      %p289 = scmp.lt.s32.totalorder %s288, 3
      %s290 = scalar_select %p289, %s288, 3
      %s291 = smul.addr %s290, 8
      %s292 = scalar_lea.vmem %s2, %s291
      %p293 = pneg %p120
      %p294 = pneg %p117
      %s295 = smul.u32 4, %s22
      %s296 = smul.u32 2, %s23
      %p297 = scmp.lt.s32.totalorder %s21, 1
      %s298 = scalar_select %p297, %s21, 1
      %p299 = scmp.lt.s32.totalorder %s295, 3
      %s300 = scalar_select %p299, %s295, 3
      %p301 = scmp.lt.s32.totalorder %s296, 1
      %s302 = scalar_select %p301, %s296, 1
      %s303 = smul.addr %s300, 2
      %s304 = sadd.s32 %s302, %s303
      %s305 = smul.addr %s298, 8
      %s306 = sadd.s32 %s304, %s305
      %s307 = smul.addr %s306, 8
      %s308 = scalar_lea.vmem %s3, %s307
      %p309 = pneg %p150
      %p310 = pneg %p147
      %p311 = pneg %p180
      %p312 = pneg %p177
      %s313 = smul.u32 4, %s22
      %s314 = smul.u32 2, %s23
      %p315 = scmp.lt.s32.totalorder %s21, 1
      %s316 = scalar_select %p315, %s21, 1
      %p317 = scmp.lt.s32.totalorder %s313, 3
      %s318 = scalar_select %p317, %s313, 3
      %p319 = scmp.lt.s32.totalorder %s314, 1
      %s320 = scalar_select %p319, %s314, 1
      %s321 = smul.addr %s318, 2
      %s322 = sadd.s32 %s320, %s321
      %s323 = smul.addr %s316, 8
      %s324 = sadd.s32 %s322, %s323
      %s325 = smul.addr %s324, 8
      %s326 = scalar_lea.vmem %s4, %s325
      %s327 = smul.u32 2, %s23
      %p328 = scmp.lt.s32.totalorder %s21, 1
      %s329 = scalar_select %p328, %s21, 1
      %p330 = scmp.lt.s32.totalorder %s24, 0
      %s331 = scalar_select %p330, %s24, 0
      %p332 = scmp.lt.s32.totalorder %s327, 1
      %s333 = scalar_select %p332, %s327, 1
      %s334 = smul.addr %s331, 2
      %s335 = sadd.s32 %s333, %s334
      %s336 = smul.addr %s329, 2
      %s337 = sadd.s32 %s335, %s336
      %s338 = smul.addr %s337, 4
      %s339 = scalar_lea.vmem %s0, %s338
      %s340 = smul.u32 2, %s23
      %s341 = smul.u32 4, %s22
      %p342 = scmp.lt.s32.totalorder %s341, 3
      %s343 = scalar_select %p342, %s341, 3
      %p344 = scmp.lt.s32.totalorder %s24, 0
      %s345 = scalar_select %p344, %s24, 0
      %s346 = sadd.s32 %s345, %s343
      %s347 = smul.addr %s346, 4
      %s348 = scalar_lea.vmem %s1, %s347
      %s349 = smul.u32 4, %s22
      %s350 = smul.u32 4, %s22
      %p351 = scmp.lt.s32.totalorder %s350, 3
      %s352 = scalar_select %p351, %s350, 3
      %s353 = smul.addr %s352, 8
      %s354 = scalar_lea.vmem %s2, %s353
      %s355 = smul.u32 4, %s22
      %s356 = smul.u32 4, %s22
      %s357 = smul.u32 2, %s23
      %p358 = scmp.lt.s32.totalorder %s21, 1
      %s359 = scalar_select %p358, %s21, 1
      %p360 = scmp.lt.s32.totalorder %s356, 3
      %s361 = scalar_select %p360, %s356, 3
      %p362 = scmp.lt.s32.totalorder %s357, 1
      %s363 = scalar_select %p362, %s357, 1
      %s364 = smul.addr %s361, 2
      %s365 = sadd.s32 %s363, %s364
      %s366 = smul.addr %s359, 8
      %s367 = sadd.s32 %s365, %s366
      %s368 = smul.addr %s367, 8
      %s369 = scalar_lea.vmem %s3, %s368
      %s370 = smul.u32 4, %s22
      %s371 = smul.u32 2, %s23
      %s372 = smul.u32 4, %s22
      %s373 = smul.u32 2, %s23
      %p374 = scmp.lt.s32.totalorder %s21, 1
      %s375 = scalar_select %p374, %s21, 1
      %p376 = scmp.lt.s32.totalorder %s372, 3
      %s377 = scalar_select %p376, %s372, 3
      %p378 = scmp.lt.s32.totalorder %s373, 1
      %s379 = scalar_select %p378, %s373, 1
      %s380 = smul.addr %s377, 2
      %s381 = sadd.s32 %s379, %s380
      %s382 = smul.addr %s375, 8
      %s383 = sadd.s32 %s381, %s382
      %s384 = smul.addr %s383, 8
      %s385 = scalar_lea.vmem %s4, %s384
      %s386 = smul.u32 4, %s22
      %s387 = smul.u32 2, %s23
      %p389 = scmp.eq.s32.totalorder %s24, 0
      // Predicated region
      $region37: #{bottleneck_forward.5} parent=35 // pred_check
        %p390 = pneg %p389
      $region38: #{bottleneck_forward.5} parent=35 // pred_check_branch
        %392 = sbr.rel (%p390) target = $region40
      $region39: #{bottleneck_forward.5} parent=35 // pred_region
        %393 = vst [vmem:[#allocation2] sm:$0xff] 0.0
        %394 = vst [vmem:[#allocation2 + $0x8] sm:$0xff] 0.0
        %395 = vst [vmem:[#allocation2 + $0x10] sm:$0xff] 0.0
        %396 = vst [vmem:[#allocation2 + $0x18] sm:$0xff] 0.0
        %397 = vst [vmem:[#allocation2 + $0x20] sm:$0xff] 0.0
        %398 = vst [vmem:[#allocation2 + $0x28] sm:$0xff] 0.0
        %399 = vst [vmem:[#allocation2 + $0x30] sm:$0xff] 0.0
        %400 = vst [vmem:[#allocation2 + $0x38] sm:$0xff] 0.0
      $region40: #{bottleneck_forward.5} parent=35 // pred_fallthru
        _
      %v401 = vld [vmem:[#allocation2] sm:$0xff]
      %v402 = vld [vmem:[#allocation2 + $0x8] sm:$0xff]
      %v403 = vld [vmem:[#allocation2 + $0x10] sm:$0xff]
      %v404 = vld [vmem:[#allocation2 + $0x18] sm:$0xff]
      %v405 = vld [vmem:[#allocation2 + $0x20] sm:$0xff]
      %v406 = vld [vmem:[#allocation2 + $0x28] sm:$0xff]
      %v407 = vld [vmem:[#allocation2 + $0x30] sm:$0xff]
      %v408 = vld [vmem:[#allocation2 + $0x38] sm:$0xff]
      %v409 = vld [vmem:[%s348] sm:$0xf]
      %v410 = vld [vmem:[%s348 + $0x4] sm:$0xf]
      %v411 = vld [vmem:[%s348 + $0x8] sm:$0xf]
      %v412 = vld [vmem:[%s348 + $0xc] sm:$0xf]
      %v413 = vld [vmem:[%s339] sm:$0xff]
      %v418 = vunpack.c.l.b16 %v409
      %v419 = vunpack.c.l.b16 %v410
      %v420 = vunpack.c.l.b16 %v411
      %v421 = vunpack.c.l.b16 %v412
      %v422 = vpack.c.b16 %v419, %v418
      %v423 = vpack.c.b16 %v421, %v420
      %v425 = vunpack.c.l.b16 %v413
      %v426 = vunpack.c.h.b16 %v413
      %v427 = vpack.c.b16 %v425, %v425
      %v428 = vpack.c.b16 %v426, %v426
      %vm429 = vcmask 64512
      %v431 = vsel %vm429, %v422, 0
      %v434 = vsel %vm429, %v423, 0
      %vm436 = vcmask 1043456
      %v438 = vsel %vm436, %v427, 0
      %v441 = vsel %vm436, %v428, 0
      %443 = vmatprep.subr.bf16.mxu0 %v441
      %444 = vmatpush1.bf16.msra.mxu0 %v438
      %445 = vmatprep.subr.bf16.mxu0 0
      %446 = vmatpush1.bf16.msra.mxu0 0
      %447 = vmatprep.subr.bf16.mxu0 0
      %448 = vmatpush1.bf16.msra.mxu0 0
      %449 = vmatprep.subr.bf16.mxu0 0
      %450 = vmatpush1.bf16.msra.mxu0 0
      %451 = vmatprep.subr.bf16.mxu0 0
      %452 = vmatpush1.bf16.msra.mxu0 0
      %453 = vmatprep.subr.bf16.mxu0 0
      %454 = vmatpush1.bf16.msra.mxu0 0
      %455 = vmatprep.subr.bf16.mxu0 0
      %456 = vmatpush1.bf16.msra.mxu0 0
      %457 = vmatprep.subr.bf16.mxu0 0
      %458 = vmatpush1.bf16.msra.mxu0 0
      %459 = vmatprep.subr.bf16.mxu0 0
      %460 = vmatpush1.bf16.msra.mxu0 0
      %461 = vmatprep.subr.bf16.mxu0 0
      %462 = vmatpush1.bf16.msra.mxu0 0
      %463 = vmatprep.subr.bf16.mxu0 0
      %464 = vmatpush1.bf16.msra.mxu0 0
      %465 = vmatprep.subr.bf16.mxu0 0
      %466 = vmatpush1.bf16.msra.mxu0 0
      %467 = vmatprep.subr.bf16.mxu0 0
      %468 = vmatpush1.bf16.msra.mxu0 0
      %469 = vmatprep.subr.bf16.mxu0 0
      %470 = vmatpush1.bf16.msra.mxu0 0
      %471 = vmatprep.subr.bf16.mxu0 0
      %472 = vmatpush1.bf16.msra.mxu0 0
      %473 = vmatprep.subr.bf16.mxu0 0
      %474 = vmatpush1.bf16.msra.mxu0 0
      %475 = vmatprep.mubr.bf16.mxu0 0
      %476 = vmatmul.mubr.bf16.gmra.mrb[0].mxu0 %v431
      %v477 = vpop.f32.mrb[0].mxu0
      %v478 = vadd.f32 0.0, %v477
      %v479 = vpop.f32.mrb[0].mxu0
      %v480 = vadd.f32 0.0, %v479
      %v481 = vpop.f32.mrb[0].mxu0
      %v482 = vadd.f32 0.0, %v481
      %v483 = vpop.f32.mrb[0].mxu0
      %v484 = vadd.f32 0.0, %v483
      %485 = vmatprep.mubr.bf16.mxu0 0
      %486 = vmatmul.mubr.bf16.gmra.mrb[0].mxu0 %v434
      %v487 = vpop.f32.mrb[0].mxu0
      %v488 = vadd.f32 0.0, %v487
      %v489 = vpop.f32.mrb[0].mxu0
      %v490 = vadd.f32 0.0, %v489
      %v491 = vpop.f32.mrb[0].mxu0
      %v492 = vadd.f32 0.0, %v491
      %v493 = vpop.f32.mrb[0].mxu0
      %v494 = vadd.f32 0.0, %v493
      %495 = vdwg.mxu0
      %v496 = vadd.f32 %v401, %v478
      %v497 = vadd.f32 %v402, %v480
      %v498 = vadd.f32 %v403, %v482
      %v499 = vadd.f32 %v404, %v484
      %v500 = vadd.f32 %v405, %v488
      %v501 = vadd.f32 %v406, %v490
      %v502 = vadd.f32 %v407, %v492
      %v503 = vadd.f32 %v408, %v494
      %504 = vst [vmem:[#allocation2] sm:$0xff] %v496
      %505 = vst [vmem:[#allocation2 + $0x8] sm:$0xff] %v497
      %506 = vst [vmem:[#allocation2 + $0x10] sm:$0xff] %v498
      %507 = vst [vmem:[#allocation2 + $0x18] sm:$0xff] %v499
      %508 = vst [vmem:[#allocation2 + $0x20] sm:$0xff] %v500
      %509 = vst [vmem:[#allocation2 + $0x28] sm:$0xff] %v501
      %510 = vst [vmem:[#allocation2 + $0x30] sm:$0xff] %v502
      %511 = vst [vmem:[#allocation2 + $0x38] sm:$0xff] %v503
      // Predicated region
      $region41: #{bottleneck_forward.5} parent=35 // pred_check
        %p512 = pneg %p389
      $region42: #{bottleneck_forward.5} parent=35 // pred_check_branch
        %514 = sbr.rel (%p512) target = $region44
      $region43: #{bottleneck_forward.5} parent=35 // pred_region
        %v515 = vld [vmem:[#allocation2] sm:$0xff]
        %v516 = vld [vmem:[#allocation2 + $0x8] sm:$0xff]
        %v517 = vld [vmem:[#allocation2 + $0x10] sm:$0xff]
        %v518 = vld [vmem:[#allocation2 + $0x18] sm:$0xff]
        %v519 = vld [vmem:[#allocation2 + $0x20] sm:$0xff]
        %v520 = vld [vmem:[#allocation2 + $0x28] sm:$0xff]
        %v521 = vld [vmem:[#allocation2 + $0x30] sm:$0xff]
        %v522 = vld [vmem:[#allocation2 + $0x38] sm:$0xff]
        %v523 = vld [vmem:[%s354] sm:$0xff]
        %v524 = vld [vmem:[%s354 + $0x8] sm:$0xff]
        %v525 = vld [vmem:[%s354 + $0x10] sm:$0xff]
        %v526 = vld [vmem:[%s354 + $0x18] sm:$0xff]
        %528 = vset.pattern.permute.xlu0 0
        %529 = vperm.xlu0 %528, %v523
        %v530 = vpop.permute.xlu0 %529
        %533 = vset.pattern.permute.xlu0 0
        %534 = vperm.xlu0 %533, %v524
        %v535 = vpop.permute.xlu0 %534
        %538 = vset.pattern.permute.xlu0 0
        %539 = vperm.xlu0 %538, %v525
        %v540 = vpop.permute.xlu0 %539
        %543 = vset.pattern.permute.xlu0 0
        %544 = vperm.xlu0 %543, %v526
        %v545 = vpop.permute.xlu0 %544
        %v547 = vadd.f32 %v515, %v530
        %v548 = vadd.f32 %v516, %v530
        %v549 = vadd.f32 %v517, %v535
        %v550 = vadd.f32 %v518, %v535
        %v551 = vadd.f32 %v519, %v540
        %v552 = vadd.f32 %v520, %v540
        %v553 = vadd.f32 %v521, %v545
        %v554 = vadd.f32 %v522, %v545
        %v555 = vld [vmem:[%s369] sm:$0xff]
        %v556 = vld [vmem:[%s369 + $0x8] sm:$0xff]
        %v557 = vld [vmem:[%s369 + $0x10] sm:$0xff]
        %v558 = vld [vmem:[%s369 + $0x18] sm:$0xff]
        %v559 = vld [vmem:[%s369 + $0x20] sm:$0xff]
        %v560 = vld [vmem:[%s369 + $0x28] sm:$0xff]
        %v561 = vld [vmem:[%s369 + $0x30] sm:$0xff]
        %v562 = vld [vmem:[%s369 + $0x38] sm:$0xff]
        %v563 = vadd.f32 %v547, %v555
        %v564 = vadd.f32 %v548, %v556
        %v565 = vadd.f32 %v549, %v557
        %v566 = vadd.f32 %v550, %v558
        %v567 = vadd.f32 %v551, %v559
        %v568 = vadd.f32 %v552, %v560
        %v569 = vadd.f32 %v553, %v561
        %v570 = vadd.f32 %v554, %v562
        %v571 = vmax.f32 %v563, 0.0
        %v572 = vmax.f32 %v564, 0.0
        %v573 = vmax.f32 %v565, 0.0
        %v574 = vmax.f32 %v566, 0.0
        %v575 = vmax.f32 %v567, 0.0
        %v576 = vmax.f32 %v568, 0.0
        %v577 = vmax.f32 %v569, 0.0
        %v578 = vmax.f32 %v570, 0.0
        %579 = vst [vmem:[%s385] sm:$0xff] %v571
        %580 = vst [vmem:[%s385 + $0x8] sm:$0xff] %v572
        %581 = vst [vmem:[%s385 + $0x10] sm:$0xff] %v573
        %582 = vst [vmem:[%s385 + $0x18] sm:$0xff] %v574
        %583 = vst [vmem:[%s385 + $0x20] sm:$0xff] %v575
        %584 = vst [vmem:[%s385 + $0x28] sm:$0xff] %v576
        %585 = vst [vmem:[%s385 + $0x30] sm:$0xff] %v577
        %586 = vst [vmem:[%s385 + $0x38] sm:$0xff] %v578
      $region44: #{bottleneck_forward.5} parent=35 // pred_fallthru
        _
      %s587 = smul.u32 4, %s22
      %s588 = smul.u32 2, %s23
      %p589 = scmp.lt.s32.totalorder %s21, 1
      %s590 = scalar_select %p589, %s21, 1
      %p591 = scmp.lt.s32.totalorder %s587, 3
      %s592 = scalar_select %p591, %s587, 3
      %p593 = scmp.lt.s32.totalorder %s588, 1
      %s594 = scalar_select %p593, %s588, 1
      %s595 = smul.addr %s592, 2
      %s596 = sadd.s32 %s594, %s595
      %s597 = smul.addr %s590, 8
      %s598 = sadd.s32 %s596, %s597
      %s599 = smul.addr %s598, 8
      %s600 = scalar_lea.vmem %s4, %s599
      // Predicated region
      $region45: #{bottleneck_forward.5} parent=35 // pred_check
        %p601 = pneg %p177
      $region46: #{bottleneck_forward.5} parent=35 // pred_check_branch
        %603 = sbr.rel (%p601) target = $region48
      $region47: #{bottleneck_forward.5} parent=35 // pred_region
        %s604 = smul.u32 4, %s22
        %s605 = smul.u32 2, %s23
      $region48: #{bottleneck_forward.5} parent=35 // pred_fallthru
        _
    $region36: #{bottleneck_forward.5} parent=5 // pred_fallthru
      _
    %p606 = scmp.le.s32.totalorder 2, %s10
    // Predicated region
    $region49: #{bottleneck_forward.5} parent=5 // pred_check
      %p607 = pneg %p606
    $region50: #{bottleneck_forward.5} parent=5 // pred_check_branch
      %609 = sbr.rel (%p607) target = $region52
    $region51: #{bottleneck_forward.5} parent=5 // pred_region
      %s610 = ssub.s32 %s10, 2
      // Predicated region
      $region53: #{bottleneck_forward.5} parent=51 // pred_check
        %p611 = pneg %p183
      $region54: #{bottleneck_forward.5} parent=51 // pred_check_branch
        %613 = sbr.rel (%p611) target = $region56
      $region55: #{bottleneck_forward.5} parent=51 // pred_region
        %s614 = smul.u32 4, %s26
        %s615 = smul.u32 2, %s27
        %p616 = scmp.lt.s32.totalorder %s25, 1
        %s617 = scalar_select %p616, %s25, 1
        %p618 = scmp.lt.s32.totalorder %s614, 3
        %s619 = scalar_select %p618, %s614, 3
        %p620 = scmp.lt.s32.totalorder %s615, 1
        %s621 = scalar_select %p620, %s615, 1
        %s622 = smul.addr %s619, 2
        %s623 = sadd.s32 %s621, %s622
        %s624 = smul.addr %s617, 8
        %s625 = sadd.s32 %s623, %s624
        %s626 = smul.addr %s625, 8
        %s627 = scalar_lea.vmem %s4, %s626
      $region56: #{bottleneck_forward.5} parent=51 // pred_fallthru
        _
    $region52: #{bottleneck_forward.5} parent=5 // pred_fallthru
      _
  $region6: #{bottleneck_forward.5} parent=0 // loop_footer
    %s14 = sadd.s32 1, %s10
  $region7: #{bottleneck_forward.5} parent=0 // loop_footer_branch
    %9 = sbr.rel target = $region3
  $region8: #{bottleneck_forward.5} parent=0 // loop_exit
    _

// kernel: bottleneck_forward.3
$region0: #{bottleneck_forward.3}
  #allocation0 [shape = 'u32[]', space=smem, size = 0x4, offset = 0x4, fixed_abs, tag = 'smem constant byte address 0x4 - core index']
  #allocation1 [shape = 'u32[144,128]{1,0:T(1,128)}', space=vmem, size = 0x12000, scoped, tag = 'internal scratch']
  #allocation2 [shape = 'f32[8,256]{1,0:T(8,128)}', space=vmem, size = 0x2000, scoped, tag = 'scratch operand']
  %s0 = inlined_call_operand.vmem [shape: f32[2,32,256], index: 0, kind: input, shape index: {}]
  %s1 = inlined_call_operand.vmem [shape: bf16[8,32], index: 1, kind: input, shape index: {}]
  %s2 = inlined_call_operand.vmem [shape: f32[8,1], index: 2, kind: input, shape index: {}]
  %s3 = inlined_call_operand.vmem [shape: bf16[2,8,256], index: 3, kind: output, shape index: {}]
  %s4 = sld [smem:[#allocation0]]
  $region53: #{bottleneck_forward.3} parent=0
    _
  %s6 = ssub.s32 1, %s4
  %s7 = scalar_select 0, %s6, %s4
  loop: start=0, step=1, limit=4
  $region2: #{bottleneck_forward.3} parent=0 // loop_pre_header
    _
  $region3: #{bottleneck_forward.3} parent=0 // loop_header
    %s9 = sphi 0, %s13
    %p10 = scmp.ge.s32.totalorder %s9, 4
    %s16 = sphi 0, %s42
    %s17 = sphi 0, %s38
    %s18 = sphi 0, %s34
    %s19 = sphi 0, %s30
    %s20 = sphi 0, %s16
    %s21 = sphi 0, %s17
    %s22 = sphi 0, %s18
    %s23 = sphi 0, %s19
    %s24 = sphi 0, %s20
    %s25 = sphi 0, %s21
    %s26 = sphi 0, %s22
    %s27 = sphi 0, %s23
    %s49 = sphi 0, %s51
    %s52 = sphi 0, %s49
    %s53 = sphi 0, %s52
    %s69 = sphi 0, %s53
    %s77 = sphi 0, %s79
    %s80 = sphi 0, %s77
    %s81 = sphi 0, %s80
    %s97 = sphi 0, %s81
    %s103 = sphi 0, %s105
    %s106 = sphi 0, %s103
    %s107 = sphi 0, %s106
    %s123 = sphi 0, %s107
    %s133 = sphi 0, %s135
    %s136 = sphi 0, %s133
    %s137 = sphi 0, %s136
    %s153 = sphi 0, %s137
  $region4: #{bottleneck_forward.3} parent=0 // loop_header_branch
    %12 = sbr.rel (%p10) target = $region8
  $region5: #{bottleneck_forward.3} parent=0 // loop_body
    %s14 = ssub.s32 %s9, 1
    %s15 = ssub.s32 %s9, 2
    %s28 = sadd.s32 1, %s19
    %p29 = scmp.ge.s32.totalorder %s28, 1
    %s30 = scalar_select %p29, 0, %s28
    %s31 = sadd.s32 1, %s18
    %s32 = scalar_select %p29, %s31, %s18
    %p33 = scmp.ge.s32.totalorder %s32, 1
    %s34 = scalar_select %p33, 0, %s32
    %s35 = sadd.s32 1, %s17
    %s36 = scalar_select %p33, %s35, %s17
    %p37 = scmp.ge.s32.totalorder %s36, 1
    %s38 = scalar_select %p37, 0, %s36
    %s39 = sadd.s32 1, %s16
    %s40 = scalar_select %p37, %s39, %s16
    %p41 = scmp.ge.s32.totalorder %s40, 2
    %s42 = scalar_select %p41, 0, %s40
    %s43 = ssub.s32 %s16, %s42
    %s44 = ssub.s32 %s19, %s30
    %s45 = sor.u32 %s43, %s44
    %s46 = ssub.s32 %s18, %s34
    %s47 = sor.u32 %s45, %s46
    %p48 = scmp.eq.s32.totalorder %s47, 0
    %s50 = sadd.s32 %s49, 1
    %s51 = scalar_select %p48, %s49, %s50
    %p54 = pneg %p48
    %p55 = scmp.eq.s32.totalorder %s9, 1
    %p56 = por %p54, %p55
    %p57 = scmp.ne.s32.totalorder %s49, %s52
    %p58 = scmp.eq.s32.totalorder %s9, 0
    %p59 = por %p57, %p58
    %p60 = scmp.ne.s32.totalorder %s49, %s52
    %p61 = scmp.eq.s32.totalorder %s14, 1
    %p62 = por %p60, %p61
    %p63 = scmp.ne.s32.totalorder %s52, %s53
    %p64 = scmp.eq.s32.totalorder %s14, 0
    %p65 = por %p63, %p64
    %p66 = scmp.ne.s32.totalorder %s52, %s53
    %p67 = scmp.eq.s32.totalorder %s15, 1
    %p68 = por %p66, %p67
    %p70 = scmp.ne.s32.totalorder %s53, %s69
    %p71 = scmp.eq.s32.totalorder %s15, 0
    %p72 = por %p70, %p71
    %s73 = ssub.s32 %s17, %s38
    %s74 = ssub.s32 %s19, %s30
    %s75 = sor.u32 %s73, %s74
    %p76 = scmp.eq.s32.totalorder %s75, 0
    %s78 = sadd.s32 %s77, 1
    %s79 = scalar_select %p76, %s77, %s78
    %p82 = pneg %p76
    %p83 = scmp.eq.s32.totalorder %s9, 1
    %p84 = por %p82, %p83
    %p85 = scmp.ne.s32.totalorder %s77, %s80
    %p86 = scmp.eq.s32.totalorder %s9, 0
    %p87 = por %p85, %p86
    %p88 = scmp.ne.s32.totalorder %s77, %s80
    %p89 = scmp.eq.s32.totalorder %s14, 1
    %p90 = por %p88, %p89
    %p91 = scmp.ne.s32.totalorder %s80, %s81
    %p92 = scmp.eq.s32.totalorder %s14, 0
    %p93 = por %p91, %p92
    %p94 = scmp.ne.s32.totalorder %s80, %s81
    %p95 = scmp.eq.s32.totalorder %s15, 1
    %p96 = por %p94, %p95
    %p98 = scmp.ne.s32.totalorder %s81, %s97
    %p99 = scmp.eq.s32.totalorder %s15, 0
    %p100 = por %p98, %p99
    %s101 = ssub.s32 %s17, %s38
    %p102 = scmp.eq.s32.totalorder %s101, 0
    %s104 = sadd.s32 %s103, 1
    %s105 = scalar_select %p102, %s103, %s104
    %p108 = pneg %p102
    %p109 = scmp.eq.s32.totalorder %s9, 1
    %p110 = por %p108, %p109
    %p111 = scmp.ne.s32.totalorder %s103, %s106
    %p112 = scmp.eq.s32.totalorder %s9, 0
    %p113 = por %p111, %p112
    %p114 = scmp.ne.s32.totalorder %s103, %s106
    %p115 = scmp.eq.s32.totalorder %s14, 1
    %p116 = por %p114, %p115
    %p117 = scmp.ne.s32.totalorder %s106, %s107
    %p118 = scmp.eq.s32.totalorder %s14, 0
    %p119 = por %p117, %p118
    %p120 = scmp.ne.s32.totalorder %s106, %s107
    %p121 = scmp.eq.s32.totalorder %s15, 1
    %p122 = por %p120, %p121
    %p124 = scmp.ne.s32.totalorder %s107, %s123
    %p125 = scmp.eq.s32.totalorder %s15, 0
    %p126 = por %p124, %p125
    %s127 = ssub.s32 %s16, %s42
    %s128 = ssub.s32 %s17, %s38
    %s129 = sor.u32 %s127, %s128
    %s130 = ssub.s32 %s18, %s34
    %s131 = sor.u32 %s129, %s130
    %p132 = scmp.eq.s32.totalorder %s131, 0
    %s134 = sadd.s32 %s133, 1
    %s135 = scalar_select %p132, %s133, %s134
    %p138 = pneg %p132
    %p139 = scmp.eq.s32.totalorder %s9, 1
    %p140 = por %p138, %p139
    %p141 = scmp.ne.s32.totalorder %s133, %s136
    %p142 = scmp.eq.s32.totalorder %s9, 0
    %p143 = por %p141, %p142
    %p144 = scmp.ne.s32.totalorder %s133, %s136
    %p145 = scmp.eq.s32.totalorder %s14, 1
    %p146 = por %p144, %p145
    %p147 = scmp.ne.s32.totalorder %s136, %s137
    %p148 = scmp.eq.s32.totalorder %s14, 0
    %p149 = por %p147, %p148
    %p150 = scmp.ne.s32.totalorder %s136, %s137
    %p151 = scmp.eq.s32.totalorder %s15, 1
    %p152 = por %p150, %p151
    %p154 = scmp.ne.s32.totalorder %s137, %s153
    %p155 = scmp.eq.s32.totalorder %s15, 0
    %p156 = por %p154, %p155
    %p157 = scmp.le.s32.totalorder 1, %s9
    %p158 = scmp.lt.s32.totalorder %s9, 3
    %p159 = pnand %p157, %p158
    %p160 = pneg %p159
    // Predicated region
    $region9: #{bottleneck_forward.3} parent=5 // pred_check
      _
    $region10: #{bottleneck_forward.3} parent=5 // pred_check_branch
      %162 = sbr.rel (%p159) target = $region12
    $region11: #{bottleneck_forward.3} parent=5 // pred_region
      %s163 = ssub.s32 %s9, 1
      // Predicated region
      $region13: #{bottleneck_forward.3} parent=11 // pred_check
        %p164 = pneg %p93
      $region14: #{bottleneck_forward.3} parent=11 // pred_check_branch
        %166 = sbr.rel (%p164) target = $region16
      $region15: #{bottleneck_forward.3} parent=11 // pred_region
        %p167 = scmp.lt.s32.totalorder %s21, 0
        %s168 = scalar_select %p167, %s21, 0
        %p169 = scmp.lt.s32.totalorder %s23, 0
        %s170 = scalar_select %p169, %s23, 0
        %s171 = sadd.s32 %s170, %s168
        %s172 = smul.addr %s171, 4
        %s173 = scalar_lea.vmem %s1, %s172
      $region16: #{bottleneck_forward.3} parent=11 // pred_fallthru
        _
      // Predicated region
      $region17: #{bottleneck_forward.3} parent=11 // pred_check
        %p174 = pneg %p119
      $region18: #{bottleneck_forward.3} parent=11 // pred_check_branch
        %176 = sbr.rel (%p174) target = $region20
      $region19: #{bottleneck_forward.3} parent=11 // pred_region
        %p177 = scmp.lt.s32.totalorder %s21, 0
        %s178 = scalar_select %p177, %s21, 0
        %s179 = smul.addr %s178, 8
        %s180 = scalar_lea.vmem %s2, %s179
      $region20: #{bottleneck_forward.3} parent=11 // pred_fallthru
        _
    $region12: #{bottleneck_forward.3} parent=5 // pred_fallthru
      _
    %p181 = scmp.lt.s32.totalorder %s9, 2
    // Predicated region
    $region21: #{bottleneck_forward.3} parent=5 // pred_check
      %p182 = pneg %p181
    $region22: #{bottleneck_forward.3} parent=5 // pred_check_branch
      %184 = sbr.rel (%p182) target = $region24
    $region23: #{bottleneck_forward.3} parent=5 // pred_region
      // Predicated region
      $region25: #{bottleneck_forward.3} parent=23 // pred_check
        %p185 = pneg %p59
      $region26: #{bottleneck_forward.3} parent=23 // pred_check_branch
        %187 = sbr.rel (%p185) target = $region28
      $region27: #{bottleneck_forward.3} parent=23 // pred_region
        %s188 = smul.u32 4, %s19
        %s189 = smul.u32 2, %s18
        %p190 = scmp.lt.s32.totalorder %s16, 1
        %s191 = scalar_select %p190, %s16, 1
        %p192 = scmp.lt.s32.totalorder %s188, 3
        %s193 = scalar_select %p192, %s188, 3
        %p194 = scmp.lt.s32.totalorder %s189, 1
        %s195 = scalar_select %p194, %s189, 1
        %s196 = smul.addr %s193, 2
        %s197 = sadd.s32 %s195, %s196
        %s198 = smul.addr %s191, 8
        %s199 = sadd.s32 %s197, %s198
        %s200 = smul.addr %s199, 8
        %s201 = scalar_lea.vmem %s0, %s200
        %s202 = smul.u32 4, %s19
        %s203 = smul.u32 2, %s18
      $region28: #{bottleneck_forward.3} parent=23 // pred_fallthru
        _
    $region24: #{bottleneck_forward.3} parent=5 // pred_fallthru
      _
    %p204 = scmp.le.s32.totalorder 1, %s9
    %p205 = scmp.lt.s32.totalorder %s9, 3
    %p206 = pnand %p204, %p205
    %p207 = pneg %p206
    // Predicated region
    $region29: #{bottleneck_forward.3} parent=5 // pred_check
      _
    $region30: #{bottleneck_forward.3} parent=5 // pred_check_branch
      %209 = sbr.rel (%p206) target = $region32
    $region31: #{bottleneck_forward.3} parent=5 // pred_region
      %s210 = ssub.s32 %s9, 1
      %s211 = smul.u32 4, %s23
      %s212 = smul.u32 2, %s22
      %p213 = scmp.lt.s32.totalorder %s20, 1
      %s214 = scalar_select %p213, %s20, 1
      %p215 = scmp.lt.s32.totalorder %s211, 3
      %s216 = scalar_select %p215, %s211, 3
      %p217 = scmp.lt.s32.totalorder %s212, 1
      %s218 = scalar_select %p217, %s212, 1
      %s219 = smul.addr %s216, 2
      %s220 = sadd.s32 %s218, %s219
      %s221 = smul.addr %s214, 8
      %s222 = sadd.s32 %s220, %s221
      %s223 = smul.addr %s222, 8
      %s224 = scalar_lea.vmem %s0, %s223
      %p225 = pneg %p65
      %p226 = pneg %p62
      %p227 = scmp.lt.s32.totalorder %s21, 0
      %s228 = scalar_select %p227, %s21, 0
      %p229 = scmp.lt.s32.totalorder %s23, 0
      %s230 = scalar_select %p229, %s23, 0
      %s231 = sadd.s32 %s230, %s228
      %s232 = smul.addr %s231, 4
      %s233 = scalar_lea.vmem %s1, %s232
      %p234 = pneg %p93
      %p235 = pneg %p90
      %p236 = scmp.lt.s32.totalorder %s21, 0
      %s237 = scalar_select %p236, %s21, 0
      %s238 = smul.addr %s237, 8
      %s239 = scalar_lea.vmem %s2, %s238
      %p240 = pneg %p119
      %p241 = pneg %p116
      %p242 = pneg %p149
      %p243 = pneg %p146
      %s244 = smul.u32 2, %s22
      %p245 = scmp.lt.s32.totalorder %s20, 1
      %s246 = scalar_select %p245, %s20, 1
      %p247 = scmp.lt.s32.totalorder %s21, 0
      %s248 = scalar_select %p247, %s21, 0
      %p249 = scmp.lt.s32.totalorder %s244, 1
      %s250 = scalar_select %p249, %s244, 1
      %s251 = smul.addr %s248, 2
      %s252 = sadd.s32 %s250, %s251
      %s253 = smul.addr %s246, 2
      %s254 = sadd.s32 %s252, %s253
      %s255 = smul.addr %s254, 4
      %s256 = scalar_lea.vmem %s3, %s255
      %s257 = smul.u32 4, %s23
      %s258 = smul.u32 2, %s22
      %p259 = scmp.lt.s32.totalorder %s20, 1
      %s260 = scalar_select %p259, %s20, 1
      %p261 = scmp.lt.s32.totalorder %s257, 3
      %s262 = scalar_select %p261, %s257, 3
      %p263 = scmp.lt.s32.totalorder %s258, 1
      %s264 = scalar_select %p263, %s258, 1
      %s265 = smul.addr %s262, 2
      %s266 = sadd.s32 %s264, %s265
      %s267 = smul.addr %s260, 8
      %s268 = sadd.s32 %s266, %s267
      %s269 = smul.addr %s268, 8
      %s270 = scalar_lea.vmem %s0, %s269
      %s271 = smul.u32 4, %s23
      %s272 = smul.u32 2, %s22
      %p273 = scmp.lt.s32.totalorder %s21, 0
      %s274 = scalar_select %p273, %s21, 0
      %p275 = scmp.lt.s32.totalorder %s23, 0
      %s276 = scalar_select %p275, %s23, 0
      %s277 = sadd.s32 %s276, %s274
      %s278 = smul.addr %s277, 4
      %s279 = scalar_lea.vmem %s1, %s278
      %p280 = scmp.lt.s32.totalorder %s21, 0
      %s281 = scalar_select %p280, %s21, 0
      %s282 = smul.addr %s281, 8
      %s283 = scalar_lea.vmem %s2, %s282
      %s284 = smul.u32 2, %s22
      %p285 = scmp.lt.s32.totalorder %s20, 1
      %s286 = scalar_select %p285, %s20, 1
      %p287 = scmp.lt.s32.totalorder %s21, 0
      %s288 = scalar_select %p287, %s21, 0
      %p289 = scmp.lt.s32.totalorder %s284, 1
      %s290 = scalar_select %p289, %s284, 1
      %s291 = smul.addr %s288, 2
      %s292 = sadd.s32 %s290, %s291
      %s293 = smul.addr %s286, 2
      %s294 = sadd.s32 %s292, %s293
      %s295 = smul.addr %s294, 4
      %s296 = scalar_lea.vmem %s3, %s295
      %s297 = smul.u32 2, %s22
      %p299 = scmp.eq.s32.totalorder %s23, 0
      // Predicated region
      $region33: #{bottleneck_forward.3} parent=31 // pred_check
        %p300 = pneg %p299
      $region34: #{bottleneck_forward.3} parent=31 // pred_check_branch
        %302 = sbr.rel (%p300) target = $region36
      $region35: #{bottleneck_forward.3} parent=31 // pred_region
        %303 = vst [vmem:[#allocation2] sm:$0xff] 0.0
        %304 = vst [vmem:[#allocation2 + $0x8] sm:$0xff] 0.0
      $region36: #{bottleneck_forward.3} parent=31 // pred_fallthru
        _
      %v305 = vld [vmem:[#allocation2] sm:$0xff]
      %v306 = vld [vmem:[#allocation2 + $0x8] sm:$0xff]
      %v307 = vld [vmem:[%s279] sm:$0xf]
      %v308 = vld [vmem:[%s270] sm:$0xff]
      %v309 = vld [vmem:[%s270 + $0x8] sm:$0xff]
      %v310 = vld [vmem:[%s270 + $0x10] sm:$0xff]
      %v311 = vld [vmem:[%s270 + $0x18] sm:$0xff]
      %v312 = vld [vmem:[%s270 + $0x20] sm:$0xff]
      %v313 = vld [vmem:[%s270 + $0x28] sm:$0xff]
      %v314 = vld [vmem:[%s270 + $0x30] sm:$0xff]
      %v315 = vld [vmem:[%s270 + $0x38] sm:$0xff]
      %v316 = vpack.c.bf16 %v310, %v308
      %v317 = vpack.c.bf16 %v311, %v309
      %v318 = vpack.c.bf16 %v314, %v312
      %v319 = vpack.c.bf16 %v315, %v313
      %vm320 = vcmask 261120
      %v322 = vsel %vm320, %v307, 0
      %324 = vmatprep.subr.bf16.mxu0 %v317
      %325 = vmatpush1.bf16.msra.mxu0 %v316
      %326 = vmatprep.subr.bf16.mxu0 %v319
      %327 = vmatpush1.bf16.msra.mxu0 %v318
      %328 = vmatprep.subr.bf16.mxu0 0
      %329 = vmatpush1.bf16.msra.mxu0 0
      %330 = vmatprep.subr.bf16.mxu0 0
      %331 = vmatpush1.bf16.msra.mxu0 0
      %332 = vmatprep.subr.bf16.mxu0 0
      %333 = vmatpush1.bf16.msra.mxu0 0
      %334 = vmatprep.subr.bf16.mxu0 0
      %335 = vmatpush1.bf16.msra.mxu0 0
      %336 = vmatprep.subr.bf16.mxu0 0
      %337 = vmatpush1.bf16.msra.mxu0 0
      %338 = vmatprep.subr.bf16.mxu0 0
      %339 = vmatpush1.bf16.msra.mxu0 0
      %340 = vmatprep.subr.bf16.mxu0 0
      %341 = vmatpush1.bf16.msra.mxu0 0
      %342 = vmatprep.subr.bf16.mxu0 0
      %343 = vmatpush1.bf16.msra.mxu0 0
      %344 = vmatprep.subr.bf16.mxu0 0
      %345 = vmatpush1.bf16.msra.mxu0 0
      %346 = vmatprep.subr.bf16.mxu0 0
      %347 = vmatpush1.bf16.msra.mxu0 0
      %348 = vmatprep.subr.bf16.mxu0 0
      %349 = vmatpush1.bf16.msra.mxu0 0
      %350 = vmatprep.subr.bf16.mxu0 0
      %351 = vmatpush1.bf16.msra.mxu0 0
      %352 = vmatprep.subr.bf16.mxu0 0
      %353 = vmatpush1.bf16.msra.mxu0 0
      %354 = vmatprep.subr.bf16.mxu0 0
      %355 = vmatpush1.bf16.msra.mxu0 0
      %356 = vmatprep.mubr.bf16.mxu0 0
      %357 = vmatmul.mubr.bf16.gmra.mrb[0].mxu0 %v322
      %v358 = vpop.f32.mrb[0].mxu0
      %v359 = vadd.f32 0.0, %v358
      %v360 = vpop.f32.mrb[0].mxu0
      %v361 = vadd.f32 0.0, %v360
      %v362 = vpop.f32.mrb[0].mxu0
      %v363 = vpop.f32.mrb[0].mxu0
      %364 = vdwg.mxu0
      %v365 = vadd.f32 %v305, %v359
      %v366 = vadd.f32 %v306, %v361
      %367 = vst [vmem:[#allocation2] sm:$0xff] %v365
      %368 = vst [vmem:[#allocation2 + $0x8] sm:$0xff] %v366
      // Predicated region
      $region37: #{bottleneck_forward.3} parent=31 // pred_check
        %p369 = pneg %p299
      $region38: #{bottleneck_forward.3} parent=31 // pred_check_branch
        %371 = sbr.rel (%p369) target = $region40
      $region39: #{bottleneck_forward.3} parent=31 // pred_region
        %v372 = vld [vmem:[#allocation2] sm:$0xff]
        %v373 = vld [vmem:[#allocation2 + $0x8] sm:$0xff]
        %v374 = vld [vmem:[%s283] sm:$0xff]
        %376 = vset.pattern.permute.xlu0 0
        %377 = vperm.xlu0 %376, %v374
        %v378 = vpop.permute.xlu0 %377
        %v380 = vadd.f32 %v372, %v378
        %v381 = vadd.f32 %v373, %v378
        %v382 = vmax.f32 %v380, 0.0
        %v383 = vmax.f32 %v381, 0.0
        %v384 = vpack.c.bf16 %v382, %v382
        %v385 = vpack.c.bf16 %v383, %v383
        %v388 = vunpack.c.l.b16 %v384
        %v389 = vunpack.c.l.b16 %v385
        %v390 = vpack.c.b16 %v389, %v388
        %392 = vst [vmem:[%s296] sm:$0xff] %v390
      $region40: #{bottleneck_forward.3} parent=31 // pred_fallthru
        _
      %s393 = smul.u32 2, %s22
      %p394 = scmp.lt.s32.totalorder %s20, 1
      %s395 = scalar_select %p394, %s20, 1
      %p396 = scmp.lt.s32.totalorder %s21, 0
      %s397 = scalar_select %p396, %s21, 0
      %p398 = scmp.lt.s32.totalorder %s393, 1
      %s399 = scalar_select %p398, %s393, 1
      %s400 = smul.addr %s397, 2
      %s401 = sadd.s32 %s399, %s400
      %s402 = smul.addr %s395, 2
      %s403 = sadd.s32 %s401, %s402
      %s404 = smul.addr %s403, 4
      %s405 = scalar_lea.vmem %s3, %s404
      // Predicated region
      $region41: #{bottleneck_forward.3} parent=31 // pred_check
        %p406 = pneg %p146
      $region42: #{bottleneck_forward.3} parent=31 // pred_check_branch
        %408 = sbr.rel (%p406) target = $region44
      $region43: #{bottleneck_forward.3} parent=31 // pred_region
        %s409 = smul.u32 2, %s22
      $region44: #{bottleneck_forward.3} parent=31 // pred_fallthru
        _
    $region32: #{bottleneck_forward.3} parent=5 // pred_fallthru
      _
    %p410 = scmp.le.s32.totalorder 2, %s9
    // Predicated region
    $region45: #{bottleneck_forward.3} parent=5 // pred_check
      %p411 = pneg %p410
    $region46: #{bottleneck_forward.3} parent=5 // pred_check_branch
      %413 = sbr.rel (%p411) target = $region48
    $region47: #{bottleneck_forward.3} parent=5 // pred_region
      %s414 = ssub.s32 %s9, 2
      // Predicated region
      $region49: #{bottleneck_forward.3} parent=47 // pred_check
        %p415 = pneg %p152
      $region50: #{bottleneck_forward.3} parent=47 // pred_check_branch
        %417 = sbr.rel (%p415) target = $region52
      $region51: #{bottleneck_forward.3} parent=47 // pred_region
        %s418 = smul.u32 2, %s26
        %p419 = scmp.lt.s32.totalorder %s24, 1
        %s420 = scalar_select %p419, %s24, 1
        %p421 = scmp.lt.s32.totalorder %s25, 0
        %s422 = scalar_select %p421, %s25, 0
        %p423 = scmp.lt.s32.totalorder %s418, 1
        %s424 = scalar_select %p423, %s418, 1
        %s425 = smul.addr %s422, 2
        %s426 = sadd.s32 %s424, %s425
        %s427 = smul.addr %s420, 2
        %s428 = sadd.s32 %s426, %s427
        %s429 = smul.addr %s428, 4
        %s430 = scalar_lea.vmem %s3, %s429
      $region52: #{bottleneck_forward.3} parent=47 // pred_fallthru
        _
    $region48: #{bottleneck_forward.3} parent=5 // pred_fallthru
      _
  $region6: #{bottleneck_forward.3} parent=0 // loop_footer
    %s13 = sadd.s32 1, %s9
  $region7: #{bottleneck_forward.3} parent=0 // loop_footer_branch
    %8 = sbr.rel target = $region3
  $region8: #{bottleneck_forward.3} parent=0 // loop_exit
    _

</llo_original>
